<compile_context>
chip_gen: v6e
topology: v6e:2x2x1
jax: 0.10.0
libtpu: 0.0.40
codegen_flags: <defaults>
</compile_context>

<pallas_src>
import jax
import jax.numpy as jnp
from jax.experimental import pallas as pl
from jax.experimental.pallas import tpu as pltpu

LANE = 128


def _round_up(n, m):
    return ((n + m - 1) // m) * m


def mnist_ae_kernel(x_ref,
                    w1_ref, b1_ref,
                    w2_ref, b2_ref,
                    w3_ref, b3_ref,
                    w4_ref, b4_ref,
                    out_ref):
    # x tile arrives in bf16; all MXU ops take bf16 operands, accumulate in f32.
    x = x_ref[...]

    # inputL + ReLU : (T, 784) @ (784, E) -> (T, E)
    h = jnp.dot(x, w1_ref[...], preferred_element_type=jnp.float32) + b1_ref[...]
    h = jnp.maximum(h, 0.0)

    # encL + ReLU : (T, E) @ (E, Lp) -> (T, Lp)
    z = jnp.dot(h.astype(jnp.bfloat16), w2_ref[...],
                preferred_element_type=jnp.float32) + b2_ref[...]
    z = jnp.maximum(z, 0.0)

    # latentL + ReLU : (T, Lp) @ (Lp, E) -> (T, E)
    g = jnp.dot(z.astype(jnp.bfloat16), w3_ref[...],
                preferred_element_type=jnp.float32) + b3_ref[...]
    g = jnp.maximum(g, 0.0)

    # decL + sigmoid : (T, E) @ (E, 784) -> (T, 784)
    y = jnp.dot(g.astype(jnp.bfloat16), w4_ref[...],
                preferred_element_type=jnp.float32) + b4_ref[...]
    # sigmoid(y) == 0.5 * tanh(0.5 * y) + 0.5 : one EUP push per vreg (vs
    # exp + reciprocal = two), exact, and the mul/add riders fill free VALU slots.
    out_ref[...] = (0.5 * jnp.tanh(0.5 * y) + 0.5).astype(out_ref.dtype)


def mnist_ae_forward(x, params, *, tile_b=512):
    """x: (B, D) float32 (unpadded feature dim).  params: weights stored
    transposed (in, out) in bf16 with the ED/latent dims lane-padded; biases
    (1, out) in f32.  Returns (B, D) float32."""
    B, D = x.shape
    w1, b1 = params["w1"], params["b1"]
    w2, b2 = params["w2"], params["b2"]
    w3, b3 = params["w3"], params["b3"]
    w4, b4 = params["w4"], params["b4"]

    assert w1.shape[0] == D and w4.shape[1] == D
    e_pad = w1.shape[1]      # padded EDUnits (multiple of 128)
    l_pad = w2.shape[1]      # padded latent (multiple of 128)

    # Keep >= 2 grid steps (v7x dual-TensorCore load balance) while not tiling
    # below 8 sublanes; never exceed the requested tile.
    tile_b_eff = max(8, min(tile_b, _round_up(pl.cdiv(B, 2), 8)))
    b_pad = _round_up(B, tile_b_eff)

    # Single wrapper-side cast to bf16 (halves streamed input bytes); small
    # batch-only pad when B doesn't divide the tile.
    x_in = x.astype(jnp.bfloat16)
    if b_pad != B:
        x_in = jnp.pad(x_in, ((0, b_pad - B), (0, 0)))

    grid = (b_pad // tile_b_eff,)

    def resident(arr):
        # Full-array block, same block index every grid step -> stays in VMEM.
        return pl.BlockSpec(arr.shape, lambda i: (0, 0))

    in_specs = [
        # Streamed x tiles: full 784-wide feature extent (== full array dim, so
        # the (8,128) rule is satisfied; no feature padding needed).
        pl.BlockSpec((tile_b_eff, D), lambda i: (i, 0)),
        resident(w1), resident(b1),
        resident(w2), resident(b2),
        resident(w3), resident(b3),
        resident(w4), resident(b4),
    ]
    out_spec = pl.BlockSpec((tile_b_eff, D), lambda i: (i, 0))

    flops = 2 * b_pad * (D * e_pad + e_pad * l_pad + l_pad * e_pad + e_pad * D)
    bytes_accessed = (
        b_pad * D * 2            # x in (bf16)
        + b_pad * D * 4          # out (f32)
        + sum(params[f"w{i}"].size * 2 for i in range(1, 5))   # bf16 weights
        + sum(params[f"b{i}"].size * 4 for i in range(1, 5)))  # f32 biases

    out = pl.pallas_call(
        mnist_ae_kernel,
        out_shape=jax.ShapeDtypeStruct((b_pad, D), jnp.float32),
        grid=grid,
        in_specs=in_specs,
        out_specs=out_spec,
        compiler_params=pltpu.CompilerParams(
            dimension_semantics=("parallel",)),
        cost_estimate=pl.CostEstimate(
            flops=flops,
            transcendentals=b_pad * D,          # one tanh per output element
            bytes_accessed=bytes_accessed),
    )(x_in, w1, b1, w2, b2, w3, b3, w4, b4)

    if b_pad != B:
        out = out[:B]
    return out


def init_params(key, in_dim, ed_units, latent_units):
    """PyTorch-Linear-style init U(-1/sqrt(fan_in), 1/sqrt(fan_in)).
    Weights stored transposed as (in, out) and cast to bf16; only the EDUnits /
    latent dims are zero-padded to multiples of 128 (the 784 feature dims stay
    unpadded).  Padding is exact: padded bias columns are 0 so padded hidden
    lanes are ReLU(0)=0, and padded weight rows are 0 so they contribute
    nothing downstream."""
    ed_pad = _round_up(ed_units, LANE)
    lat_pad = _round_up(latent_units, LANE)
    dims = [(in_dim, ed_units, in_dim, ed_pad),          # inputL
            (ed_units, latent_units, ed_pad, lat_pad),   # encL
            (latent_units, ed_units, lat_pad, ed_pad),   # latentL
            (ed_units, in_dim, ed_pad, in_dim)]          # decL
    params = {}
    for idx, (fan_in, fan_out, pin, pout) in enumerate(dims, start=1):
        key, kw, kb = jax.random.split(key, 3)
        bound = 1.0 / float(fan_in) ** 0.5
        w = jax.random.uniform(kw, (fan_in, fan_out), jnp.float32, -bound, bound)
        b = jax.random.uniform(kb, (1, fan_out), jnp.float32, -bound, bound)
        w_pad = jnp.zeros((pin, pout), jnp.float32).at[:fan_in, :fan_out].set(w)
        b_pad = jnp.zeros((1, pout), jnp.float32).at[:, :fan_out].set(b)
        params[f"w{idx}"] = w_pad.astype(jnp.bfloat16)
        params[f"b{idx}"] = b_pad
    return params


if __name__ == "__main__":
    # MNIST-like: len(data.keys()) without 'label' -> 784 pixel features.
    IN_DIM = 784
    ED_UNITS = 128
    LATENT_UNITS = 32
    BATCH = 256            # -> 2 grid steps of 128 rows each

    key = jax.random.PRNGKey(0)
    key, kx = jax.random.split(key)
    x = jax.random.uniform(kx, (BATCH, IN_DIM), jnp.float32)  # pixel-like inputs

    params = init_params(key, IN_DIM, ED_UNITS, LATENT_UNITS)

    out = mnist_ae_forward(x, params)
    out = jax.block_until_ready(out)

    # Pure-JAX reference mirroring the kernel math (bf16 operands, f32 accum).
    def ref(x, p):
        def lin(a, w, b):
            return jnp.dot(a.astype(jnp.bfloat16), w,
                           preferred_element_type=jnp.float32) + b

        h = jax.nn.relu(lin(x, p["w1"], p["b1"]))
        z = jax.nn.relu(lin(h, p["w2"], p["b2"]))
        g = jax.nn.relu(lin(z, p["w3"], p["b3"]))
        y = lin(g, p["w4"], p["b4"])
        return jax.nn.sigmoid(y)[:, :IN_DIM]

    expected = ref(x, params)
    assert out.shape == (BATCH, IN_DIM)
    # Kernel sigmoid is exact (tanh form); tolerance only covers hardware
    # exp/tanh approximation differences between kernel and XLA reference.
    assert jnp.allclose(out, expected, atol=2e-3, rtol=2e-3), float(
        jnp.max(jnp.abs(out - expected)))

    print("KERNEL_OK")
</pallas_src>

<mosaic_0001>
module attributes {stable_mosaic.version = 11 : i64} {
  func.func @mnist_ae_kernel(%arg0: i32, %arg1: memref<128x784xbf16, #tpu.memory_space<vmem>>, %arg2: memref<784x128xbf16, #tpu.memory_space<vmem>>, %arg3: memref<1x128xf32, #tpu.memory_space<vmem>>, %arg4: memref<128x128xbf16, #tpu.memory_space<vmem>>, %arg5: memref<1x128xf32, #tpu.memory_space<vmem>>, %arg6: memref<128x128xbf16, #tpu.memory_space<vmem>>, %arg7: memref<1x128xf32, #tpu.memory_space<vmem>>, %arg8: memref<128x784xbf16, #tpu.memory_space<vmem>>, %arg9: memref<1x784xf32, #tpu.memory_space<vmem>>, %arg10: memref<128x784xf32, #tpu.memory_space<vmem>>) attributes {dimension_semantics = [#tpu.dimension_semantics<parallel>], iteration_bounds = array<i64: 2>, scalar_prefetch = 0 : i64, scratch_operands = 0 : i64, tpu.core_type = #tpu.core_type<tc>, window_params = [{transform_indices = @transform_0, window_bounds = array<i64: 128, 784>}, {pipeline_mode = #tpu.pipeline_mode<synchronous>, transform_indices = @transform_1, window_bounds = array<i64: 784, 128>}, {pipeline_mode = #tpu.pipeline_mode<synchronous>, transform_indices = @transform_2, window_bounds = array<i64: 1, 128>}, {pipeline_mode = #tpu.pipeline_mode<synchronous>, transform_indices = @transform_3, window_bounds = array<i64: 128, 128>}, {pipeline_mode = #tpu.pipeline_mode<synchronous>, transform_indices = @transform_4, window_bounds = array<i64: 1, 128>}, {pipeline_mode = #tpu.pipeline_mode<synchronous>, transform_indices = @transform_5, window_bounds = array<i64: 128, 128>}, {pipeline_mode = #tpu.pipeline_mode<synchronous>, transform_indices = @transform_6, window_bounds = array<i64: 1, 128>}, {pipeline_mode = #tpu.pipeline_mode<synchronous>, transform_indices = @transform_7, window_bounds = array<i64: 128, 784>}, {pipeline_mode = #tpu.pipeline_mode<synchronous>, transform_indices = @transform_8, window_bounds = array<i64: 1, 784>}, {transform_indices = @transform_9, window_bounds = array<i64: 128, 784>}]} {
    %c0 = arith.constant 0 : index
    %c0_0 = arith.constant 0 : index
    %0 = vector.load %arg1[%c0, %c0_0] : memref<128x784xbf16, #tpu.memory_space<vmem>>, vector<128x784xbf16>
    %c0_1 = arith.constant 0 : index
    %c0_2 = arith.constant 0 : index
    %1 = vector.load %arg2[%c0_1, %c0_2] : memref<784x128xbf16, #tpu.memory_space<vmem>>, vector<784x128xbf16>
    %cst = arith.constant dense<0.000000e+00> : vector<128x128xf32>
    %2 = tpu.matmul %0, %1, %cst {dimension_numbers = #tpu.dot_dimension_numbers<[1], [0], [0], [1], [0, 0, 1, 1], [], []>} : vector<128x784xbf16>, vector<784x128xbf16>, vector<128x128xf32> -> vector<128x128xf32>
    %c0_3 = arith.constant 0 : index
    %c0_4 = arith.constant 0 : index
    %3 = vector.load %arg3[%c0_3, %c0_4] : memref<1x128xf32, #tpu.memory_space<vmem>>, vector<1x128xf32>
    %4 = vector.broadcast %3 : vector<1x128xf32> to vector<128x128xf32>
    %5 = arith.addf %2, %4 : vector<128x128xf32>
    %cst_5 = arith.constant 0.000000e+00 : f32
    %6 = vector.broadcast %cst_5 : f32 to vector<128x128xf32>
    %7 = arith.maximumf %5, %6 : vector<128x128xf32>
    %8 = arith.truncf %7 : vector<128x128xf32> to vector<128x128xbf16>
    %c0_6 = arith.constant 0 : index
    %c0_7 = arith.constant 0 : index
    %9 = vector.load %arg4[%c0_6, %c0_7] : memref<128x128xbf16, #tpu.memory_space<vmem>>, vector<128x128xbf16>
    %cst_8 = arith.constant dense<0.000000e+00> : vector<128x128xf32>
    %10 = tpu.matmul %8, %9, %cst_8 {dimension_numbers = #tpu.dot_dimension_numbers<[1], [0], [0], [1], [0, 0, 1, 1], [], []>} : vector<128x128xbf16>, vector<128x128xbf16>, vector<128x128xf32> -> vector<128x128xf32>
    %c0_9 = arith.constant 0 : index
    %c0_10 = arith.constant 0 : index
    %11 = vector.load %arg5[%c0_9, %c0_10] : memref<1x128xf32, #tpu.memory_space<vmem>>, vector<1x128xf32>
    %12 = vector.broadcast %11 : vector<1x128xf32> to vector<128x128xf32>
    %13 = arith.addf %10, %12 : vector<128x128xf32>
    %cst_11 = arith.constant 0.000000e+00 : f32
    %14 = vector.broadcast %cst_11 : f32 to vector<128x128xf32>
    %15 = arith.maximumf %13, %14 : vector<128x128xf32>
    %16 = arith.truncf %15 : vector<128x128xf32> to vector<128x128xbf16>
    %c0_12 = arith.constant 0 : index
    %c0_13 = arith.constant 0 : index
    %17 = vector.load %arg6[%c0_12, %c0_13] : memref<128x128xbf16, #tpu.memory_space<vmem>>, vector<128x128xbf16>
    %cst_14 = arith.constant dense<0.000000e+00> : vector<128x128xf32>
    %18 = tpu.matmul %16, %17, %cst_14 {dimension_numbers = #tpu.dot_dimension_numbers<[1], [0], [0], [1], [0, 0, 1, 1], [], []>} : vector<128x128xbf16>, vector<128x128xbf16>, vector<128x128xf32> -> vector<128x128xf32>
    %c0_15 = arith.constant 0 : index
    %c0_16 = arith.constant 0 : index
    %19 = vector.load %arg7[%c0_15, %c0_16] : memref<1x128xf32, #tpu.memory_space<vmem>>, vector<1x128xf32>
    %20 = vector.broadcast %19 : vector<1x128xf32> to vector<128x128xf32>
    %21 = arith.addf %18, %20 : vector<128x128xf32>
    %cst_17 = arith.constant 0.000000e+00 : f32
    %22 = vector.broadcast %cst_17 : f32 to vector<128x128xf32>
    %23 = arith.maximumf %21, %22 : vector<128x128xf32>
    %24 = arith.truncf %23 : vector<128x128xf32> to vector<128x128xbf16>
    %c0_18 = arith.constant 0 : index
    %c0_19 = arith.constant 0 : index
    %25 = vector.load %arg8[%c0_18, %c0_19] : memref<128x784xbf16, #tpu.memory_space<vmem>>, vector<128x784xbf16>
    %cst_20 = arith.constant dense<0.000000e+00> : vector<128x784xf32>
    %26 = tpu.matmul %24, %25, %cst_20 {dimension_numbers = #tpu.dot_dimension_numbers<[1], [0], [0], [1], [0, 0, 1, 1], [], []>} : vector<128x128xbf16>, vector<128x784xbf16>, vector<128x784xf32> -> vector<128x784xf32>
    %c0_21 = arith.constant 0 : index
    %c0_22 = arith.constant 0 : index
    %27 = vector.load %arg9[%c0_21, %c0_22] : memref<1x784xf32, #tpu.memory_space<vmem>>, vector<1x784xf32>
    %28 = vector.broadcast %27 : vector<1x784xf32> to vector<128x784xf32>
    %29 = arith.addf %26, %28 : vector<128x784xf32>
    %cst_23 = arith.constant 5.000000e-01 : f32
    %30 = vector.broadcast %cst_23 : f32 to vector<128x784xf32>
    %31 = arith.mulf %30, %29 : vector<128x784xf32>
    %32 = math.tanh %31 : vector<128x784xf32>
    %cst_24 = arith.constant 5.000000e-01 : f32
    %33 = vector.broadcast %cst_24 : f32 to vector<128x784xf32>
    %34 = arith.mulf %33, %32 : vector<128x784xf32>
    %cst_25 = arith.constant 5.000000e-01 : f32
    %35 = vector.broadcast %cst_25 : f32 to vector<128x784xf32>
    %36 = arith.addf %34, %35 : vector<128x784xf32>
    %c0_26 = arith.constant 0 : index
    %c0_27 = arith.constant 0 : index
    %37 = vector.load %arg10[%c0_26, %c0_27] : memref<128x784xf32, #tpu.memory_space<vmem>>, vector<128x784xf32>
    tpu.vector_store %arg10[%c0_26, %c0_27], %36 {strides = array<i32>} : memref<128x784xf32, #tpu.memory_space<vmem>>, vector<128x784xf32>,
    return
  }
  func.func @transform_0(%arg0: i32) -> (i32, i32) {
    %c0_i32 = arith.constant 0 : i32
    %c0_i32_0 = arith.constant 0 : i32
    return %arg0, %c0_i32 : i32, i32
  }
  func.func @transform_1(%arg0: i32) -> (i32, i32) {
    %c0_i32 = arith.constant 0 : i32
    %c0_i32_0 = arith.constant 0 : i32
    %c0_i32_1 = arith.constant 0 : i32
    return %c0_i32, %c0_i32_0 : i32, i32
  }
  func.func @transform_2(%arg0: i32) -> (i32, i32) {
    %c0_i32 = arith.constant 0 : i32
    %c0_i32_0 = arith.constant 0 : i32
    %c0_i32_1 = arith.constant 0 : i32
    return %c0_i32, %c0_i32_0 : i32, i32
  }
  func.func @transform_3(%arg0: i32) -> (i32, i32) {
    %c0_i32 = arith.constant 0 : i32
    %c0_i32_0 = arith.constant 0 : i32
    %c0_i32_1 = arith.constant 0 : i32
    return %c0_i32, %c0_i32_0 : i32, i32
  }
  func.func @transform_4(%arg0: i32) -> (i32, i32) {
    %c0_i32 = arith.constant 0 : i32
    %c0_i32_0 = arith.constant 0 : i32
    %c0_i32_1 = arith.constant 0 : i32
    return %c0_i32, %c0_i32_0 : i32, i32
  }
  func.func @transform_5(%arg0: i32) -> (i32, i32) {
    %c0_i32 = arith.constant 0 : i32
    %c0_i32_0 = arith.constant 0 : i32
    %c0_i32_1 = arith.constant 0 : i32
    return %c0_i32, %c0_i32_0 : i32, i32
  }
  func.func @transform_6(%arg0: i32) -> (i32, i32) {
    %c0_i32 = arith.constant 0 : i32
    %c0_i32_0 = arith.constant 0 : i32
    %c0_i32_1 = arith.constant 0 : i32
    return %c0_i32, %c0_i32_0 : i32, i32
  }
  func.func @transform_7(%arg0: i32) -> (i32, i32) {
    %c0_i32 = arith.constant 0 : i32
    %c0_i32_0 = arith.constant 0 : i32
    %c0_i32_1 = arith.constant 0 : i32
    return %c0_i32, %c0_i32_0 : i32, i32
  }
  func.func @transform_8(%arg0: i32) -> (i32, i32) {
    %c0_i32 = arith.constant 0 : i32
    %c0_i32_0 = arith.constant 0 : i32
    %c0_i32_1 = arith.constant 0 : i32
    return %c0_i32, %c0_i32_0 : i32, i32
  }
  func.func @transform_9(%arg0: i32) -> (i32, i32) {
    %c0_i32 = arith.constant 0 : i32
    %c0_i32_0 = arith.constant 0 : i32
    return %arg0, %c0_i32 : i32, i32
  }
}

</mosaic_0001>

<llo_original>
// kernel: tpu_custom_call.1
$region0: #{tpu_custom_call.1}
  #allocation0 [shape = 'u32[]', space=smem, size = 0x4, offset = 0x4, fixed_abs, tag = 'smem constant byte address 0x4 - core index']
  #allocation1 [shape = 'u32[144,128]{1,0:T(1,128)}', space=vmem, size = 0x12000, scoped, tag = 'internal scratch']
  %s0 = inlined_call_operand.vmem [shape: bf16[256,784], index: 0, kind: input, shape index: {}]
  %s1 = inlined_call_operand.vmem [shape: bf16[784,128], index: 1, kind: input, shape index: {}]
  %s2 = inlined_call_operand.vmem [shape: f32[1,128], index: 2, kind: input, shape index: {}]
  %s3 = inlined_call_operand.vmem [shape: bf16[128,128], index: 3, kind: input, shape index: {}]
  %s4 = inlined_call_operand.vmem [shape: f32[1,128], index: 4, kind: input, shape index: {}]
  %s5 = inlined_call_operand.vmem [shape: bf16[128,128], index: 5, kind: input, shape index: {}]
  %s6 = inlined_call_operand.vmem [shape: f32[1,128], index: 6, kind: input, shape index: {}]
  %s7 = inlined_call_operand.vmem [shape: bf16[128,784], index: 7, kind: input, shape index: {}]
  %s8 = inlined_call_operand.vmem [shape: f32[1,784], index: 8, kind: input, shape index: {}]
  %s9 = inlined_call_operand.vmem [shape: f32[256,784], index: 9, kind: output, shape index: {}]
  %s10 = sld [smem:[#allocation0]]
  $region69: #{tpu_custom_call.1} parent=0
    _
  %s12 = ssub.s32 1, %s10
  %s13 = scalar_select 0, %s12, %s10
  loop: start=0, step=1, limit=4
  $region2: #{tpu_custom_call.1} parent=0 // loop_pre_header
    _
  $region3: #{tpu_custom_call.1} parent=0 // loop_header
    %s15 = sphi 0, %s19
    %p16 = scmp.ge.s32.totalorder %s15, 4
    %s25 = sphi 0, %s27
    %s28 = sphi 0, %s25
    %s29 = sphi 0, %s28
    %s45 = sphi 0, %s29
    %s49 = sphi 0, %s49
    %s51 = sphi 0, %s49
    %s52 = sphi 0, %s51
    %s66 = sphi 0, %s52
    %s70 = sphi 0, %s70
    %s72 = sphi 0, %s70
    %s73 = sphi 0, %s72
    %s87 = sphi 0, %s73
    %s91 = sphi 0, %s91
    %s93 = sphi 0, %s91
    %s94 = sphi 0, %s93
    %s108 = sphi 0, %s94
    %s112 = sphi 0, %s112
    %s114 = sphi 0, %s112
    %s115 = sphi 0, %s114
    %s129 = sphi 0, %s115
    %s133 = sphi 0, %s133
    %s135 = sphi 0, %s133
    %s136 = sphi 0, %s135
    %s150 = sphi 0, %s136
    %s154 = sphi 0, %s154
    %s156 = sphi 0, %s154
    %s157 = sphi 0, %s156
    %s171 = sphi 0, %s157
    %s175 = sphi 0, %s175
    %s177 = sphi 0, %s175
    %s178 = sphi 0, %s177
    %s192 = sphi 0, %s178
    %s196 = sphi 0, %s196
    %s198 = sphi 0, %s196
    %s199 = sphi 0, %s198
    %s213 = sphi 0, %s199
    %s219 = sphi 0, %s221
    %s222 = sphi 0, %s219
    %s223 = sphi 0, %s222
    %s239 = sphi 0, %s223
  $region4: #{tpu_custom_call.1} parent=0 // loop_header_branch
    %18 = sbr.rel (%p16) target = $region8
  $region5: #{tpu_custom_call.1} parent=0 // loop_body
    %s20 = ssub.s32 %s15, 1
    %s21 = ssub.s32 %s15, 2
    %s22 = sadd.s32 %s15, 1
    %s23 = ssub.s32 %s15, %s22
    %p24 = scmp.eq.s32.totalorder %s23, 0
    %s26 = sadd.s32 %s25, 1
    %s27 = scalar_select %p24, %s25, %s26
    %p30 = pneg %p24
    %p31 = scmp.eq.s32.totalorder %s15, 1
    %p32 = por %p30, %p31
    %p33 = scmp.ne.s32.totalorder %s25, %s28
    %p34 = scmp.eq.s32.totalorder %s15, 0
    %p35 = por %p33, %p34
    %p36 = scmp.ne.s32.totalorder %s25, %s28
    %p37 = scmp.eq.s32.totalorder %s20, 1
    %p38 = por %p36, %p37
    %p39 = scmp.ne.s32.totalorder %s28, %s29
    %p40 = scmp.eq.s32.totalorder %s20, 0
    %p41 = por %p39, %p40
    %p42 = scmp.ne.s32.totalorder %s28, %s29
    %p43 = scmp.eq.s32.totalorder %s21, 1
    %p44 = por %p42, %p43
    %p46 = scmp.ne.s32.totalorder %s29, %s45
    %p47 = scmp.eq.s32.totalorder %s21, 0
    %p48 = por %p46, %p47
    %s50 = sadd.s32 %s49, 1
    %p53 = scmp.eq.s32.totalorder %s15, 1
    %p54 = scmp.ne.s32.totalorder %s49, %s51
    %p55 = scmp.eq.s32.totalorder %s15, 0
    %p56 = por %p54, %p55
    %p57 = scmp.ne.s32.totalorder %s49, %s51
    %p58 = scmp.eq.s32.totalorder %s20, 1
    %p59 = por %p57, %p58
    %p60 = scmp.ne.s32.totalorder %s51, %s52
    %p61 = scmp.eq.s32.totalorder %s20, 0
    %p62 = por %p60, %p61
    %p63 = scmp.ne.s32.totalorder %s51, %s52
    %p64 = scmp.eq.s32.totalorder %s21, 1
    %p65 = por %p63, %p64
    %p67 = scmp.ne.s32.totalorder %s52, %s66
    %p68 = scmp.eq.s32.totalorder %s21, 0
    %p69 = por %p67, %p68
    %s71 = sadd.s32 %s70, 1
    %p74 = scmp.eq.s32.totalorder %s15, 1
    %p75 = scmp.ne.s32.totalorder %s70, %s72
    %p76 = scmp.eq.s32.totalorder %s15, 0
    %p77 = por %p75, %p76
    %p78 = scmp.ne.s32.totalorder %s70, %s72
    %p79 = scmp.eq.s32.totalorder %s20, 1
    %p80 = por %p78, %p79
    %p81 = scmp.ne.s32.totalorder %s72, %s73
    %p82 = scmp.eq.s32.totalorder %s20, 0
    %p83 = por %p81, %p82
    %p84 = scmp.ne.s32.totalorder %s72, %s73
    %p85 = scmp.eq.s32.totalorder %s21, 1
    %p86 = por %p84, %p85
    %p88 = scmp.ne.s32.totalorder %s73, %s87
    %p89 = scmp.eq.s32.totalorder %s21, 0
    %p90 = por %p88, %p89
    %s92 = sadd.s32 %s91, 1
    %p95 = scmp.eq.s32.totalorder %s15, 1
    %p96 = scmp.ne.s32.totalorder %s91, %s93
    %p97 = scmp.eq.s32.totalorder %s15, 0
    %p98 = por %p96, %p97
    %p99 = scmp.ne.s32.totalorder %s91, %s93
    %p100 = scmp.eq.s32.totalorder %s20, 1
    %p101 = por %p99, %p100
    %p102 = scmp.ne.s32.totalorder %s93, %s94
    %p103 = scmp.eq.s32.totalorder %s20, 0
    %p104 = por %p102, %p103
    %p105 = scmp.ne.s32.totalorder %s93, %s94
    %p106 = scmp.eq.s32.totalorder %s21, 1
    %p107 = por %p105, %p106
    %p109 = scmp.ne.s32.totalorder %s94, %s108
    %p110 = scmp.eq.s32.totalorder %s21, 0
    %p111 = por %p109, %p110
    %s113 = sadd.s32 %s112, 1
    %p116 = scmp.eq.s32.totalorder %s15, 1
    %p117 = scmp.ne.s32.totalorder %s112, %s114
    %p118 = scmp.eq.s32.totalorder %s15, 0
    %p119 = por %p117, %p118
    %p120 = scmp.ne.s32.totalorder %s112, %s114
    %p121 = scmp.eq.s32.totalorder %s20, 1
    %p122 = por %p120, %p121
    %p123 = scmp.ne.s32.totalorder %s114, %s115
    %p124 = scmp.eq.s32.totalorder %s20, 0
    %p125 = por %p123, %p124
    %p126 = scmp.ne.s32.totalorder %s114, %s115
    %p127 = scmp.eq.s32.totalorder %s21, 1
    %p128 = por %p126, %p127
    %p130 = scmp.ne.s32.totalorder %s115, %s129
    %p131 = scmp.eq.s32.totalorder %s21, 0
    %p132 = por %p130, %p131
    %s134 = sadd.s32 %s133, 1
    %p137 = scmp.eq.s32.totalorder %s15, 1
    %p138 = scmp.ne.s32.totalorder %s133, %s135
    %p139 = scmp.eq.s32.totalorder %s15, 0
    %p140 = por %p138, %p139
    %p141 = scmp.ne.s32.totalorder %s133, %s135
    %p142 = scmp.eq.s32.totalorder %s20, 1
    %p143 = por %p141, %p142
    %p144 = scmp.ne.s32.totalorder %s135, %s136
    %p145 = scmp.eq.s32.totalorder %s20, 0
    %p146 = por %p144, %p145
    %p147 = scmp.ne.s32.totalorder %s135, %s136
    %p148 = scmp.eq.s32.totalorder %s21, 1
    %p149 = por %p147, %p148
    %p151 = scmp.ne.s32.totalorder %s136, %s150
    %p152 = scmp.eq.s32.totalorder %s21, 0
    %p153 = por %p151, %p152
    %s155 = sadd.s32 %s154, 1
    %p158 = scmp.eq.s32.totalorder %s15, 1
    %p159 = scmp.ne.s32.totalorder %s154, %s156
    %p160 = scmp.eq.s32.totalorder %s15, 0
    %p161 = por %p159, %p160
    %p162 = scmp.ne.s32.totalorder %s154, %s156
    %p163 = scmp.eq.s32.totalorder %s20, 1
    %p164 = por %p162, %p163
    %p165 = scmp.ne.s32.totalorder %s156, %s157
    %p166 = scmp.eq.s32.totalorder %s20, 0
    %p167 = por %p165, %p166
    %p168 = scmp.ne.s32.totalorder %s156, %s157
    %p169 = scmp.eq.s32.totalorder %s21, 1
    %p170 = por %p168, %p169
    %p172 = scmp.ne.s32.totalorder %s157, %s171
    %p173 = scmp.eq.s32.totalorder %s21, 0
    %p174 = por %p172, %p173
    %s176 = sadd.s32 %s175, 1
    %p179 = scmp.eq.s32.totalorder %s15, 1
    %p180 = scmp.ne.s32.totalorder %s175, %s177
    %p181 = scmp.eq.s32.totalorder %s15, 0
    %p182 = por %p180, %p181
    %p183 = scmp.ne.s32.totalorder %s175, %s177
    %p184 = scmp.eq.s32.totalorder %s20, 1
    %p185 = por %p183, %p184
    %p186 = scmp.ne.s32.totalorder %s177, %s178
    %p187 = scmp.eq.s32.totalorder %s20, 0
    %p188 = por %p186, %p187
    %p189 = scmp.ne.s32.totalorder %s177, %s178
    %p190 = scmp.eq.s32.totalorder %s21, 1
    %p191 = por %p189, %p190
    %p193 = scmp.ne.s32.totalorder %s178, %s192
    %p194 = scmp.eq.s32.totalorder %s21, 0
    %p195 = por %p193, %p194
    %s197 = sadd.s32 %s196, 1
    %p200 = scmp.eq.s32.totalorder %s15, 1
    %p201 = scmp.ne.s32.totalorder %s196, %s198
    %p202 = scmp.eq.s32.totalorder %s15, 0
    %p203 = por %p201, %p202
    %p204 = scmp.ne.s32.totalorder %s196, %s198
    %p205 = scmp.eq.s32.totalorder %s20, 1
    %p206 = por %p204, %p205
    %p207 = scmp.ne.s32.totalorder %s198, %s199
    %p208 = scmp.eq.s32.totalorder %s20, 0
    %p209 = por %p207, %p208
    %p210 = scmp.ne.s32.totalorder %s198, %s199
    %p211 = scmp.eq.s32.totalorder %s21, 1
    %p212 = por %p210, %p211
    %p214 = scmp.ne.s32.totalorder %s199, %s213
    %p215 = scmp.eq.s32.totalorder %s21, 0
    %p216 = por %p214, %p215
    %s217 = ssub.s32 %s15, %s22
    %p218 = scmp.eq.s32.totalorder %s217, 0
    %s220 = sadd.s32 %s219, 1
    %s221 = scalar_select %p218, %s219, %s220
    %p224 = pneg %p218
    %p225 = scmp.eq.s32.totalorder %s15, 1
    %p226 = por %p224, %p225
    %p227 = scmp.ne.s32.totalorder %s219, %s222
    %p228 = scmp.eq.s32.totalorder %s15, 0
    %p229 = por %p227, %p228
    %p230 = scmp.ne.s32.totalorder %s219, %s222
    %p231 = scmp.eq.s32.totalorder %s20, 1
    %p232 = por %p230, %p231
    %p233 = scmp.ne.s32.totalorder %s222, %s223
    %p234 = scmp.eq.s32.totalorder %s20, 0
    %p235 = por %p233, %p234
    %p236 = scmp.ne.s32.totalorder %s222, %s223
    %p237 = scmp.eq.s32.totalorder %s21, 1
    %p238 = por %p236, %p237
    %p240 = scmp.ne.s32.totalorder %s223, %s239
    %p241 = scmp.eq.s32.totalorder %s21, 0
    %p242 = por %p240, %p241
    %p243 = scmp.le.s32.totalorder 1, %s15
    %p244 = scmp.lt.s32.totalorder %s15, 3
    %p245 = pnand %p243, %p244
    %p246 = pneg %p245
    // Predicated region
    $region9: #{tpu_custom_call.1} parent=5 // pred_check
      _
    $region10: #{tpu_custom_call.1} parent=5 // pred_check_branch
      %248 = sbr.rel (%p245) target = $region12
    $region11: #{tpu_custom_call.1} parent=5 // pred_region
      %s249 = ssub.s32 %s15, 1
      // Predicated region
      $region13: #{tpu_custom_call.1} parent=11 // pred_check
        %p250 = pneg %p62
      $region14: #{tpu_custom_call.1} parent=11 // pred_check_branch
        %252 = sbr.rel (%p250) target = $region16
      $region15: #{tpu_custom_call.1} parent=11 // pred_region
        _
      $region16: #{tpu_custom_call.1} parent=11 // pred_fallthru
        _
      // Predicated region
      $region17: #{tpu_custom_call.1} parent=11 // pred_check
        %p253 = pneg %p83
      $region18: #{tpu_custom_call.1} parent=11 // pred_check_branch
        %255 = sbr.rel (%p253) target = $region20
      $region19: #{tpu_custom_call.1} parent=11 // pred_region
        _
      $region20: #{tpu_custom_call.1} parent=11 // pred_fallthru
        _
      // Predicated region
      $region21: #{tpu_custom_call.1} parent=11 // pred_check
        %p256 = pneg %p104
      $region22: #{tpu_custom_call.1} parent=11 // pred_check_branch
        %258 = sbr.rel (%p256) target = $region24
      $region23: #{tpu_custom_call.1} parent=11 // pred_region
        _
      $region24: #{tpu_custom_call.1} parent=11 // pred_fallthru
        _
      // Predicated region
      $region25: #{tpu_custom_call.1} parent=11 // pred_check
        %p259 = pneg %p125
      $region26: #{tpu_custom_call.1} parent=11 // pred_check_branch
        %261 = sbr.rel (%p259) target = $region28
      $region27: #{tpu_custom_call.1} parent=11 // pred_region
        _
      $region28: #{tpu_custom_call.1} parent=11 // pred_fallthru
        _
      // Predicated region
      $region29: #{tpu_custom_call.1} parent=11 // pred_check
        %p262 = pneg %p146
      $region30: #{tpu_custom_call.1} parent=11 // pred_check_branch
        %264 = sbr.rel (%p262) target = $region32
      $region31: #{tpu_custom_call.1} parent=11 // pred_region
        _
      $region32: #{tpu_custom_call.1} parent=11 // pred_fallthru
        _
      // Predicated region
      $region33: #{tpu_custom_call.1} parent=11 // pred_check
        %p265 = pneg %p167
      $region34: #{tpu_custom_call.1} parent=11 // pred_check_branch
        %267 = sbr.rel (%p265) target = $region36
      $region35: #{tpu_custom_call.1} parent=11 // pred_region
        _
      $region36: #{tpu_custom_call.1} parent=11 // pred_fallthru
        _
      // Predicated region
      $region37: #{tpu_custom_call.1} parent=11 // pred_check
        %p268 = pneg %p188
      $region38: #{tpu_custom_call.1} parent=11 // pred_check_branch
        %270 = sbr.rel (%p268) target = $region40
      $region39: #{tpu_custom_call.1} parent=11 // pred_region
        _
      $region40: #{tpu_custom_call.1} parent=11 // pred_fallthru
        _
      // Predicated region
      $region41: #{tpu_custom_call.1} parent=11 // pred_check
        %p271 = pneg %p209
      $region42: #{tpu_custom_call.1} parent=11 // pred_check_branch
        %273 = sbr.rel (%p271) target = $region44
      $region43: #{tpu_custom_call.1} parent=11 // pred_region
        _
      $region44: #{tpu_custom_call.1} parent=11 // pred_fallthru
        _
    $region12: #{tpu_custom_call.1} parent=5 // pred_fallthru
      _
    %p274 = scmp.lt.s32.totalorder %s15, 2
    // Predicated region
    $region45: #{tpu_custom_call.1} parent=5 // pred_check
      %p275 = pneg %p274
    $region46: #{tpu_custom_call.1} parent=5 // pred_check_branch
      %277 = sbr.rel (%p275) target = $region48
    $region47: #{tpu_custom_call.1} parent=5 // pred_region
      // Predicated region
      $region49: #{tpu_custom_call.1} parent=47 // pred_check
        %p278 = pneg %p35
      $region50: #{tpu_custom_call.1} parent=47 // pred_check_branch
        %280 = sbr.rel (%p278) target = $region52
      $region51: #{tpu_custom_call.1} parent=47 // pred_region
        %s281 = smul.u32 16, %s15
        %p282 = scmp.lt.s32.totalorder %s281, 31
        %s283 = scalar_select %p282, %s281, 31
        %s284 = smul.addr %s283, 7
        %s285 = smul.addr %s284, 4
        %s286 = scalar_lea.vmem %s0, %s285
        %s287 = smul.u32 16, %s15
      $region52: #{tpu_custom_call.1} parent=47 // pred_fallthru
        _
    $region48: #{tpu_custom_call.1} parent=5 // pred_fallthru
      _
    %p288 = scmp.le.s32.totalorder 1, %s15
    %p289 = scmp.lt.s32.totalorder %s15, 3
    %p290 = pnand %p288, %p289
    %p291 = pneg %p290
    // Predicated region
    $region53: #{tpu_custom_call.1} parent=5 // pred_check
      _
    $region54: #{tpu_custom_call.1} parent=5 // pred_check_branch
      %293 = sbr.rel (%p290) target = $region56
    $region55: #{tpu_custom_call.1} parent=5 // pred_region
      %s294 = ssub.s32 %s15, 1
      %s295 = smul.u32 16, %s20
      %p296 = scmp.lt.s32.totalorder %s295, 31
      %s297 = scalar_select %p296, %s295, 31
      %s298 = smul.addr %s297, 7
      %s299 = smul.addr %s298, 4
      %s300 = scalar_lea.vmem %s0, %s299
      %p301 = pneg %p41
      %p302 = pneg %p38
      %p303 = pneg %p62
      %p304 = pneg %p59
      %p305 = pneg %p83
      %p306 = pneg %p80
      %p307 = pneg %p104
      %p308 = pneg %p101
      %p309 = pneg %p125
      %p310 = pneg %p122
      %p311 = pneg %p146
      %p312 = pneg %p143
      %p313 = pneg %p167
      %p314 = pneg %p164
      %p315 = pneg %p188
      %p316 = pneg %p185
      %p317 = pneg %p209
      %p318 = pneg %p206
      %p319 = pneg %p235
      %p320 = pneg %p232
      %s321 = smul.u32 16, %s20
      %p322 = scmp.lt.s32.totalorder %s321, 31
      %s323 = scalar_select %p322, %s321, 31
      %s324 = smul.addr %s323, 7
      %s325 = smul.addr %s324, 8
      %s326 = scalar_lea.vmem %s9, %s325
      %s327 = smul.u32 16, %s20
      %p328 = scmp.lt.s32.totalorder %s327, 31
      %s329 = scalar_select %p328, %s327, 31
      %s330 = smul.addr %s329, 7
      %s331 = smul.addr %s330, 4
      %s332 = scalar_lea.vmem %s0, %s331
      %s333 = smul.u32 16, %s20
      %s334 = smul.u32 16, %s20
      %p335 = scmp.lt.s32.totalorder %s334, 31
      %s336 = scalar_select %p335, %s334, 31
      %s337 = smul.addr %s336, 7
      %s338 = smul.addr %s337, 8
      %s339 = scalar_lea.vmem %s9, %s338
      %s340 = smul.u32 16, %s20
      %v342 = vld [vmem:[%s332] sm:$0xff]
      %v343 = vld [vmem:[%s332 + $0x8] sm:$0xff]
      %v344 = vld [vmem:[%s332 + $0x10] sm:$0xff]
      %v345 = vld [vmem:[%s332 + $0x18] sm:$0xf]
      %v346 = vld [vmem:[%s332 + $0x1c] sm:$0xff]
      %v347 = vld [vmem:[%s332 + $0x24] sm:$0xff]
      %v348 = vld [vmem:[%s332 + $0x2c] sm:$0xff]
      %v349 = vld [vmem:[%s332 + $0x34] sm:$0xf]
      %v350 = vld [vmem:[%s332 + $0x38] sm:$0xff]
      %v351 = vld [vmem:[%s332 + $0x40] sm:$0xff]
      %v352 = vld [vmem:[%s332 + $0x48] sm:$0xff]
      %v353 = vld [vmem:[%s332 + $0x50] sm:$0xf]
      %v354 = vld [vmem:[%s332 + $0x54] sm:$0xff]
      %v355 = vld [vmem:[%s332 + $0x5c] sm:$0xff]
      %v356 = vld [vmem:[%s332 + $0x64] sm:$0xff]
      %v357 = vld [vmem:[%s332 + $0x6c] sm:$0xf]
      %v358 = vld [vmem:[%s332 + $0x70] sm:$0xff]
      %v359 = vld [vmem:[%s332 + $0x78] sm:$0xff]
      %v360 = vld [vmem:[%s332 + $0x80] sm:$0xff]
      %v361 = vld [vmem:[%s332 + $0x88] sm:$0xf]
      %v362 = vld [vmem:[%s332 + $0x8c] sm:$0xff]
      %v363 = vld [vmem:[%s332 + $0x94] sm:$0xff]
      %v364 = vld [vmem:[%s332 + $0x9c] sm:$0xff]
      %v365 = vld [vmem:[%s332 + $0xa4] sm:$0xf]
      %v366 = vld [vmem:[%s332 + $0xa8] sm:$0xff]
      %v367 = vld [vmem:[%s332 + $0xb0] sm:$0xff]
      %v368 = vld [vmem:[%s332 + $0xb8] sm:$0xff]
      %v369 = vld [vmem:[%s332 + $0xc0] sm:$0xf]
      %v370 = vld [vmem:[%s332 + $0xc4] sm:$0xff]
      %v371 = vld [vmem:[%s332 + $0xcc] sm:$0xff]
      %v372 = vld [vmem:[%s332 + $0xd4] sm:$0xff]
      %v373 = vld [vmem:[%s332 + $0xdc] sm:$0xf]
      %v374 = vld [vmem:[%s332 + $0xe0] sm:$0xff]
      %v375 = vld [vmem:[%s332 + $0xe8] sm:$0xff]
      %v376 = vld [vmem:[%s332 + $0xf0] sm:$0xff]
      %v377 = vld [vmem:[%s332 + $0xf8] sm:$0xf]
      %v378 = vld [vmem:[%s332 + $0xfc] sm:$0xff]
      %v379 = vld [vmem:[%s332 + $0x104] sm:$0xff]
      %v380 = vld [vmem:[%s332 + $0x10c] sm:$0xff]
      %v381 = vld [vmem:[%s332 + $0x114] sm:$0xf]
      %v382 = vld [vmem:[%s332 + $0x118] sm:$0xff]
      %v383 = vld [vmem:[%s332 + $0x120] sm:$0xff]
      %v384 = vld [vmem:[%s332 + $0x128] sm:$0xff]
      %v385 = vld [vmem:[%s332 + $0x130] sm:$0xf]
      %v386 = vld [vmem:[%s332 + $0x134] sm:$0xff]
      %v387 = vld [vmem:[%s332 + $0x13c] sm:$0xff]
      %v388 = vld [vmem:[%s332 + $0x144] sm:$0xff]
      %v389 = vld [vmem:[%s332 + $0x14c] sm:$0xf]
      %v390 = vld [vmem:[%s332 + $0x150] sm:$0xff]
      %v391 = vld [vmem:[%s332 + $0x158] sm:$0xff]
      %v392 = vld [vmem:[%s332 + $0x160] sm:$0xff]
      %v393 = vld [vmem:[%s332 + $0x168] sm:$0xf]
      %v394 = vld [vmem:[%s332 + $0x16c] sm:$0xff]
      %v395 = vld [vmem:[%s332 + $0x174] sm:$0xff]
      %v396 = vld [vmem:[%s332 + $0x17c] sm:$0xff]
      %v397 = vld [vmem:[%s332 + $0x184] sm:$0xf]
      %v398 = vld [vmem:[%s332 + $0x188] sm:$0xff]
      %v399 = vld [vmem:[%s332 + $0x190] sm:$0xff]
      %v400 = vld [vmem:[%s332 + $0x198] sm:$0xff]
      %v401 = vld [vmem:[%s332 + $0x1a0] sm:$0xf]
      %v402 = vld [vmem:[%s332 + $0x1a4] sm:$0xff]
      %v403 = vld [vmem:[%s332 + $0x1ac] sm:$0xff]
      %v404 = vld [vmem:[%s332 + $0x1b4] sm:$0xff]
      %v405 = vld [vmem:[%s332 + $0x1bc] sm:$0xf]
      %v406 = vld [vmem:[%s1] sm:$0xf]
      %v407 = vld [vmem:[%s1 + $0x4] sm:$0xf]
      %v408 = vld [vmem:[%s1 + $0x8] sm:$0xf]
      %v409 = vld [vmem:[%s1 + $0xc] sm:$0xf]
      %v410 = vld [vmem:[%s1 + $0x10] sm:$0xf]
      %v411 = vld [vmem:[%s1 + $0x14] sm:$0xf]
      %v412 = vld [vmem:[%s1 + $0x18] sm:$0xf]
      %v413 = vld [vmem:[%s1 + $0x1c] sm:$0xf]
      %v414 = vld [vmem:[%s1 + $0x20] sm:$0xf]
      %v415 = vld [vmem:[%s1 + $0x24] sm:$0xf]
      %v416 = vld [vmem:[%s1 + $0x28] sm:$0xf]
      %v417 = vld [vmem:[%s1 + $0x2c] sm:$0xf]
      %v418 = vld [vmem:[%s1 + $0x30] sm:$0xf]
      %v419 = vld [vmem:[%s1 + $0x34] sm:$0xf]
      %v420 = vld [vmem:[%s1 + $0x38] sm:$0xf]
      %v421 = vld [vmem:[%s1 + $0x3c] sm:$0xf]
      %v422 = vld [vmem:[%s1 + $0x40] sm:$0xf]
      %v423 = vld [vmem:[%s1 + $0x44] sm:$0xf]
      %v424 = vld [vmem:[%s1 + $0x48] sm:$0xf]
      %v425 = vld [vmem:[%s1 + $0x4c] sm:$0xf]
      %v426 = vld [vmem:[%s1 + $0x50] sm:$0xf]
      %v427 = vld [vmem:[%s1 + $0x54] sm:$0xf]
      %v428 = vld [vmem:[%s1 + $0x58] sm:$0xf]
      %v429 = vld [vmem:[%s1 + $0x5c] sm:$0xf]
      %v430 = vld [vmem:[%s1 + $0x60] sm:$0xf]
      %v431 = vld [vmem:[%s1 + $0x64] sm:$0xf]
      %v432 = vld [vmem:[%s1 + $0x68] sm:$0xf]
      %v433 = vld [vmem:[%s1 + $0x6c] sm:$0xf]
      %v434 = vld [vmem:[%s1 + $0x70] sm:$0xf]
      %v435 = vld [vmem:[%s1 + $0x74] sm:$0xf]
      %v436 = vld [vmem:[%s1 + $0x78] sm:$0xf]
      %v437 = vld [vmem:[%s1 + $0x7c] sm:$0xf]
      %v438 = vld [vmem:[%s1 + $0x80] sm:$0xf]
      %v439 = vld [vmem:[%s1 + $0x84] sm:$0xf]
      %v440 = vld [vmem:[%s1 + $0x88] sm:$0xf]
      %v441 = vld [vmem:[%s1 + $0x8c] sm:$0xf]
      %v442 = vld [vmem:[%s1 + $0x90] sm:$0xf]
      %v443 = vld [vmem:[%s1 + $0x94] sm:$0xf]
      %v444 = vld [vmem:[%s1 + $0x98] sm:$0xf]
      %v445 = vld [vmem:[%s1 + $0x9c] sm:$0xf]
      %v446 = vld [vmem:[%s1 + $0xa0] sm:$0xf]
      %v447 = vld [vmem:[%s1 + $0xa4] sm:$0xf]
      %v448 = vld [vmem:[%s1 + $0xa8] sm:$0xf]
      %v449 = vld [vmem:[%s1 + $0xac] sm:$0xf]
      %v450 = vld [vmem:[%s1 + $0xb0] sm:$0xf]
      %v451 = vld [vmem:[%s1 + $0xb4] sm:$0xf]
      %v452 = vld [vmem:[%s1 + $0xb8] sm:$0xf]
      %v453 = vld [vmem:[%s1 + $0xbc] sm:$0xf]
      %v454 = vld [vmem:[%s1 + $0xc0] sm:$0xf]
      %v455 = vld [vmem:[%s1 + $0xc4] sm:$0xf]
      %v456 = vld [vmem:[%s1 + $0xc8] sm:$0xf]
      %v457 = vld [vmem:[%s1 + $0xcc] sm:$0xf]
      %v458 = vld [vmem:[%s1 + $0xd0] sm:$0xf]
      %v459 = vld [vmem:[%s1 + $0xd4] sm:$0xf]
      %v460 = vld [vmem:[%s1 + $0xd8] sm:$0xf]
      %v461 = vld [vmem:[%s1 + $0xdc] sm:$0xf]
      %v462 = vld [vmem:[%s1 + $0xe0] sm:$0xf]
      %v463 = vld [vmem:[%s1 + $0xe4] sm:$0xf]
      %v464 = vld [vmem:[%s1 + $0xe8] sm:$0xf]
      %v465 = vld [vmem:[%s1 + $0xec] sm:$0xf]
      %v466 = vld [vmem:[%s1 + $0xf0] sm:$0xf]
      %v467 = vld [vmem:[%s1 + $0xf4] sm:$0xf]
      %v468 = vld [vmem:[%s1 + $0xf8] sm:$0xf]
      %v469 = vld [vmem:[%s1 + $0xfc] sm:$0xf]
      %v470 = vld [vmem:[%s1 + $0x100] sm:$0xf]
      %v471 = vld [vmem:[%s1 + $0x104] sm:$0xf]
      %v472 = vld [vmem:[%s1 + $0x108] sm:$0xf]
      %v473 = vld [vmem:[%s1 + $0x10c] sm:$0xf]
      %v474 = vld [vmem:[%s1 + $0x110] sm:$0xf]
      %v475 = vld [vmem:[%s1 + $0x114] sm:$0xf]
      %v476 = vld [vmem:[%s1 + $0x118] sm:$0xf]
      %v477 = vld [vmem:[%s1 + $0x11c] sm:$0xf]
      %v478 = vld [vmem:[%s1 + $0x120] sm:$0xf]
      %v479 = vld [vmem:[%s1 + $0x124] sm:$0xf]
      %v480 = vld [vmem:[%s1 + $0x128] sm:$0xf]
      %v481 = vld [vmem:[%s1 + $0x12c] sm:$0xf]
      %v482 = vld [vmem:[%s1 + $0x130] sm:$0xf]
      %v483 = vld [vmem:[%s1 + $0x134] sm:$0xf]
      %v484 = vld [vmem:[%s1 + $0x138] sm:$0xf]
      %v485 = vld [vmem:[%s1 + $0x13c] sm:$0xf]
      %v486 = vld [vmem:[%s1 + $0x140] sm:$0xf]
      %v487 = vld [vmem:[%s1 + $0x144] sm:$0xf]
      %v488 = vld [vmem:[%s1 + $0x148] sm:$0xf]
      %v489 = vld [vmem:[%s1 + $0x14c] sm:$0xf]
      %v490 = vld [vmem:[%s1 + $0x150] sm:$0xf]
      %v491 = vld [vmem:[%s1 + $0x154] sm:$0xf]
      %v492 = vld [vmem:[%s1 + $0x158] sm:$0xf]
      %v493 = vld [vmem:[%s1 + $0x15c] sm:$0xf]
      %v494 = vld [vmem:[%s1 + $0x160] sm:$0xf]
      %v495 = vld [vmem:[%s1 + $0x164] sm:$0xf]
      %v496 = vld [vmem:[%s1 + $0x168] sm:$0xf]
      %v497 = vld [vmem:[%s1 + $0x16c] sm:$0xf]
      %v498 = vld [vmem:[%s1 + $0x170] sm:$0xf]
      %v499 = vld [vmem:[%s1 + $0x174] sm:$0xf]
      %v500 = vld [vmem:[%s1 + $0x178] sm:$0xf]
      %v501 = vld [vmem:[%s1 + $0x17c] sm:$0xf]
      %v502 = vld [vmem:[%s1 + $0x180] sm:$0xf]
      %v503 = vld [vmem:[%s1 + $0x184] sm:$0xf]
      %v504 = vld [vmem:[%s2] sm:$0x1]
      %v506 = vlaneseq
      %v507 = vshrl.u32 %v506, 7
      %v508 = vsub.s32 0, %v507
      %v509 = vrot.slane %v504, %v508
      %v575 = vunpack.c.l.b16 %v342
      %v576 = vunpack.c.h.b16 %v342
      %v577 = vunpack.c.l.b16 %v343
      %v578 = vunpack.c.h.b16 %v343
      %v579 = vunpack.c.l.b16 %v344
      %v580 = vunpack.c.h.b16 %v344
      %v581 = vunpack.c.l.b16 %v345
      %v582 = vunpack.c.l.b16 %v346
      %v583 = vunpack.c.h.b16 %v346
      %v584 = vunpack.c.l.b16 %v347
      %v585 = vunpack.c.h.b16 %v347
      %v586 = vunpack.c.l.b16 %v348
      %v587 = vunpack.c.h.b16 %v348
      %v588 = vunpack.c.l.b16 %v349
      %v589 = vunpack.c.l.b16 %v350
      %v590 = vunpack.c.h.b16 %v350
      %v591 = vunpack.c.l.b16 %v351
      %v592 = vunpack.c.h.b16 %v351
      %v593 = vunpack.c.l.b16 %v352
      %v594 = vunpack.c.h.b16 %v352
      %v595 = vunpack.c.l.b16 %v353
      %v596 = vunpack.c.l.b16 %v354
      %v597 = vunpack.c.h.b16 %v354
      %v598 = vunpack.c.l.b16 %v355
      %v599 = vunpack.c.h.b16 %v355
      %v600 = vunpack.c.l.b16 %v356
      %v601 = vunpack.c.h.b16 %v356
      %v602 = vunpack.c.l.b16 %v357
      %v603 = vunpack.c.l.b16 %v358
      %v604 = vunpack.c.h.b16 %v358
      %v605 = vunpack.c.l.b16 %v359
      %v606 = vunpack.c.h.b16 %v359
      %v607 = vunpack.c.l.b16 %v360
      %v608 = vunpack.c.h.b16 %v360
      %v609 = vunpack.c.l.b16 %v361
      %v610 = vunpack.c.l.b16 %v362
      %v611 = vunpack.c.h.b16 %v362
      %v612 = vunpack.c.l.b16 %v363
      %v613 = vunpack.c.h.b16 %v363
      %v614 = vunpack.c.l.b16 %v364
      %v615 = vunpack.c.h.b16 %v364
      %v616 = vunpack.c.l.b16 %v365
      %v617 = vunpack.c.l.b16 %v366
      %v618 = vunpack.c.h.b16 %v366
      %v619 = vunpack.c.l.b16 %v367
      %v620 = vunpack.c.h.b16 %v367
      %v621 = vunpack.c.l.b16 %v368
      %v622 = vunpack.c.h.b16 %v368
      %v623 = vunpack.c.l.b16 %v369
      %v624 = vunpack.c.l.b16 %v370
      %v625 = vunpack.c.h.b16 %v370
      %v626 = vunpack.c.l.b16 %v371
      %v627 = vunpack.c.h.b16 %v371
      %v628 = vunpack.c.l.b16 %v372
      %v629 = vunpack.c.h.b16 %v372
      %v630 = vunpack.c.l.b16 %v373
      %v631 = vunpack.c.l.b16 %v374
      %v632 = vunpack.c.h.b16 %v374
      %v633 = vunpack.c.l.b16 %v375
      %v634 = vunpack.c.h.b16 %v375
      %v635 = vunpack.c.l.b16 %v376
      %v636 = vunpack.c.h.b16 %v376
      %v637 = vunpack.c.l.b16 %v377
      %v638 = vunpack.c.l.b16 %v378
      %v639 = vunpack.c.h.b16 %v378
      %v640 = vunpack.c.l.b16 %v379
      %v641 = vunpack.c.h.b16 %v379
      %v642 = vunpack.c.l.b16 %v380
      %v643 = vunpack.c.h.b16 %v380
      %v644 = vunpack.c.l.b16 %v381
      %v645 = vunpack.c.l.b16 %v382
      %v646 = vunpack.c.h.b16 %v382
      %v647 = vunpack.c.l.b16 %v383
      %v648 = vunpack.c.h.b16 %v383
      %v649 = vunpack.c.l.b16 %v384
      %v650 = vunpack.c.h.b16 %v384
      %v651 = vunpack.c.l.b16 %v385
      %v652 = vunpack.c.l.b16 %v386
      %v653 = vunpack.c.h.b16 %v386
      %v654 = vunpack.c.l.b16 %v387
      %v655 = vunpack.c.h.b16 %v387
      %v656 = vunpack.c.l.b16 %v388
      %v657 = vunpack.c.h.b16 %v388
      %v658 = vunpack.c.l.b16 %v389
      %v659 = vunpack.c.l.b16 %v390
      %v660 = vunpack.c.h.b16 %v390
      %v661 = vunpack.c.l.b16 %v391
      %v662 = vunpack.c.h.b16 %v391
      %v663 = vunpack.c.l.b16 %v392
      %v664 = vunpack.c.h.b16 %v392
      %v665 = vunpack.c.l.b16 %v393
      %v666 = vunpack.c.l.b16 %v394
      %v667 = vunpack.c.h.b16 %v394
      %v668 = vunpack.c.l.b16 %v395
      %v669 = vunpack.c.h.b16 %v395
      %v670 = vunpack.c.l.b16 %v396
      %v671 = vunpack.c.h.b16 %v396
      %v672 = vunpack.c.l.b16 %v397
      %v673 = vunpack.c.l.b16 %v398
      %v674 = vunpack.c.h.b16 %v398
      %v675 = vunpack.c.l.b16 %v399
      %v676 = vunpack.c.h.b16 %v399
      %v677 = vunpack.c.l.b16 %v400
      %v678 = vunpack.c.h.b16 %v400
      %v679 = vunpack.c.l.b16 %v401
      %v680 = vunpack.c.l.b16 %v402
      %v681 = vunpack.c.h.b16 %v402
      %v682 = vunpack.c.l.b16 %v403
      %v683 = vunpack.c.h.b16 %v403
      %v684 = vunpack.c.l.b16 %v404
      %v685 = vunpack.c.h.b16 %v404
      %v686 = vunpack.c.l.b16 %v405
      %v687 = vpack.c.b16 %v582, %v575
      %v688 = vpack.c.b16 %v583, %v576
      %v689 = vpack.c.b16 %v584, %v577
      %v690 = vpack.c.b16 %v585, %v578
      %v691 = vpack.c.b16 %v586, %v579
      %v692 = vpack.c.b16 %v587, %v580
      %v693 = vpack.c.b16 %v588, %v581
      %v694 = vpack.c.b16 %v596, %v589
      %v695 = vpack.c.b16 %v597, %v590
      %v696 = vpack.c.b16 %v598, %v591
      %v697 = vpack.c.b16 %v599, %v592
      %v698 = vpack.c.b16 %v600, %v593
      %v699 = vpack.c.b16 %v601, %v594
      %v700 = vpack.c.b16 %v602, %v595
      %v701 = vpack.c.b16 %v610, %v603
      %v702 = vpack.c.b16 %v611, %v604
      %v703 = vpack.c.b16 %v612, %v605
      %v704 = vpack.c.b16 %v613, %v606
      %v705 = vpack.c.b16 %v614, %v607
      %v706 = vpack.c.b16 %v615, %v608
      %v707 = vpack.c.b16 %v616, %v609
      %v708 = vpack.c.b16 %v624, %v617
      %v709 = vpack.c.b16 %v625, %v618
      %v710 = vpack.c.b16 %v626, %v619
      %v711 = vpack.c.b16 %v627, %v620
      %v712 = vpack.c.b16 %v628, %v621
      %v713 = vpack.c.b16 %v629, %v622
      %v714 = vpack.c.b16 %v630, %v623
      %v715 = vpack.c.b16 %v638, %v631
      %v716 = vpack.c.b16 %v639, %v632
      %v717 = vpack.c.b16 %v640, %v633
      %v718 = vpack.c.b16 %v641, %v634
      %v719 = vpack.c.b16 %v642, %v635
      %v720 = vpack.c.b16 %v643, %v636
      %v721 = vpack.c.b16 %v644, %v637
      %v722 = vpack.c.b16 %v652, %v645
      %v723 = vpack.c.b16 %v653, %v646
      %v724 = vpack.c.b16 %v654, %v647
      %v725 = vpack.c.b16 %v655, %v648
      %v726 = vpack.c.b16 %v656, %v649
      %v727 = vpack.c.b16 %v657, %v650
      %v728 = vpack.c.b16 %v658, %v651
      %v729 = vpack.c.b16 %v666, %v659
      %v730 = vpack.c.b16 %v667, %v660
      %v731 = vpack.c.b16 %v668, %v661
      %v732 = vpack.c.b16 %v669, %v662
      %v733 = vpack.c.b16 %v670, %v663
      %v734 = vpack.c.b16 %v671, %v664
      %v735 = vpack.c.b16 %v672, %v665
      %v736 = vpack.c.b16 %v680, %v673
      %v737 = vpack.c.b16 %v681, %v674
      %v738 = vpack.c.b16 %v682, %v675
      %v739 = vpack.c.b16 %v683, %v676
      %v740 = vpack.c.b16 %v684, %v677
      %v741 = vpack.c.b16 %v685, %v678
      %v742 = vpack.c.b16 %v686, %v679
      %v889 = vunpack.c.l.b16 %v406
      %v890 = vunpack.c.l.b16 %v407
      %v891 = vunpack.c.l.b16 %v408
      %v892 = vunpack.c.l.b16 %v409
      %v893 = vunpack.c.l.b16 %v410
      %v894 = vunpack.c.l.b16 %v411
      %v895 = vunpack.c.l.b16 %v412
      %v896 = vunpack.c.l.b16 %v413
      %v897 = vunpack.c.l.b16 %v414
      %v898 = vunpack.c.l.b16 %v415
      %v899 = vunpack.c.l.b16 %v416
      %v900 = vunpack.c.l.b16 %v417
      %v901 = vunpack.c.l.b16 %v418
      %v902 = vunpack.c.l.b16 %v419
      %v903 = vunpack.c.l.b16 %v420
      %v904 = vunpack.c.l.b16 %v421
      %v905 = vunpack.c.l.b16 %v422
      %v906 = vunpack.c.l.b16 %v423
      %v907 = vunpack.c.l.b16 %v424
      %v908 = vunpack.c.l.b16 %v425
      %v909 = vunpack.c.l.b16 %v426
      %v910 = vunpack.c.l.b16 %v427
      %v911 = vunpack.c.l.b16 %v428
      %v912 = vunpack.c.l.b16 %v429
      %v913 = vunpack.c.l.b16 %v430
      %v914 = vunpack.c.l.b16 %v431
      %v915 = vunpack.c.l.b16 %v432
      %v916 = vunpack.c.l.b16 %v433
      %v917 = vunpack.c.l.b16 %v434
      %v918 = vunpack.c.l.b16 %v435
      %v919 = vunpack.c.l.b16 %v436
      %v920 = vunpack.c.l.b16 %v437
      %v921 = vunpack.c.l.b16 %v438
      %v922 = vunpack.c.l.b16 %v439
      %v923 = vunpack.c.l.b16 %v440
      %v924 = vunpack.c.l.b16 %v441
      %v925 = vunpack.c.l.b16 %v442
      %v926 = vunpack.c.l.b16 %v443
      %v927 = vunpack.c.l.b16 %v444
      %v928 = vunpack.c.l.b16 %v445
      %v929 = vunpack.c.l.b16 %v446
      %v930 = vunpack.c.l.b16 %v447
      %v931 = vunpack.c.l.b16 %v448
      %v932 = vunpack.c.l.b16 %v449
      %v933 = vunpack.c.l.b16 %v450
      %v934 = vunpack.c.l.b16 %v451
      %v935 = vunpack.c.l.b16 %v452
      %v936 = vunpack.c.l.b16 %v453
      %v937 = vunpack.c.l.b16 %v454
      %v938 = vunpack.c.l.b16 %v455
      %v939 = vunpack.c.l.b16 %v456
      %v940 = vunpack.c.l.b16 %v457
      %v941 = vunpack.c.l.b16 %v458
      %v942 = vunpack.c.l.b16 %v459
      %v943 = vunpack.c.l.b16 %v460
      %v944 = vunpack.c.l.b16 %v461
      %v945 = vunpack.c.l.b16 %v462
      %v946 = vunpack.c.l.b16 %v463
      %v947 = vunpack.c.l.b16 %v464
      %v948 = vunpack.c.l.b16 %v465
      %v949 = vunpack.c.l.b16 %v466
      %v950 = vunpack.c.l.b16 %v467
      %v951 = vunpack.c.l.b16 %v468
      %v952 = vunpack.c.l.b16 %v469
      %v953 = vunpack.c.l.b16 %v470
      %v954 = vunpack.c.l.b16 %v471
      %v955 = vunpack.c.l.b16 %v472
      %v956 = vunpack.c.l.b16 %v473
      %v957 = vunpack.c.l.b16 %v474
      %v958 = vunpack.c.l.b16 %v475
      %v959 = vunpack.c.l.b16 %v476
      %v960 = vunpack.c.l.b16 %v477
      %v961 = vunpack.c.l.b16 %v478
      %v962 = vunpack.c.l.b16 %v479
      %v963 = vunpack.c.l.b16 %v480
      %v964 = vunpack.c.l.b16 %v481
      %v965 = vunpack.c.l.b16 %v482
      %v966 = vunpack.c.l.b16 %v483
      %v967 = vunpack.c.l.b16 %v484
      %v968 = vunpack.c.l.b16 %v485
      %v969 = vunpack.c.l.b16 %v486
      %v970 = vunpack.c.l.b16 %v487
      %v971 = vunpack.c.l.b16 %v488
      %v972 = vunpack.c.l.b16 %v489
      %v973 = vunpack.c.l.b16 %v490
      %v974 = vunpack.c.l.b16 %v491
      %v975 = vunpack.c.l.b16 %v492
      %v976 = vunpack.c.l.b16 %v493
      %v977 = vunpack.c.l.b16 %v494
      %v978 = vunpack.c.l.b16 %v495
      %v979 = vunpack.c.l.b16 %v496
      %v980 = vunpack.c.l.b16 %v497
      %v981 = vunpack.c.l.b16 %v498
      %v982 = vunpack.c.l.b16 %v499
      %v983 = vunpack.c.l.b16 %v500
      %v984 = vunpack.c.l.b16 %v501
      %v985 = vunpack.c.l.b16 %v502
      %v986 = vunpack.c.l.b16 %v503
      %v987 = vpack.c.b16 %v890, %v889
      %v988 = vpack.c.b16 %v892, %v891
      %v989 = vpack.c.b16 %v894, %v893
      %v990 = vpack.c.b16 %v896, %v895
      %v991 = vpack.c.b16 %v898, %v897
      %v992 = vpack.c.b16 %v900, %v899
      %v993 = vpack.c.b16 %v902, %v901
      %v994 = vpack.c.b16 %v904, %v903
      %v995 = vpack.c.b16 %v906, %v905
      %v996 = vpack.c.b16 %v908, %v907
      %v997 = vpack.c.b16 %v910, %v909
      %v998 = vpack.c.b16 %v912, %v911
      %v999 = vpack.c.b16 %v914, %v913
      %v1000 = vpack.c.b16 %v916, %v915
      %v1001 = vpack.c.b16 %v918, %v917
      %v1002 = vpack.c.b16 %v920, %v919
      %v1003 = vpack.c.b16 %v922, %v921
      %v1004 = vpack.c.b16 %v924, %v923
      %v1005 = vpack.c.b16 %v926, %v925
      %v1006 = vpack.c.b16 %v928, %v927
      %v1007 = vpack.c.b16 %v930, %v929
      %v1008 = vpack.c.b16 %v932, %v931
      %v1009 = vpack.c.b16 %v934, %v933
      %v1010 = vpack.c.b16 %v936, %v935
      %v1011 = vpack.c.b16 %v938, %v937
      %v1012 = vpack.c.b16 %v940, %v939
      %v1013 = vpack.c.b16 %v942, %v941
      %v1014 = vpack.c.b16 %v944, %v943
      %v1015 = vpack.c.b16 %v946, %v945
      %v1016 = vpack.c.b16 %v948, %v947
      %v1017 = vpack.c.b16 %v950, %v949
      %v1018 = vpack.c.b16 %v952, %v951
      %v1019 = vpack.c.b16 %v954, %v953
      %v1020 = vpack.c.b16 %v956, %v955
      %v1021 = vpack.c.b16 %v958, %v957
      %v1022 = vpack.c.b16 %v960, %v959
      %v1023 = vpack.c.b16 %v962, %v961
      %v1024 = vpack.c.b16 %v964, %v963
      %v1025 = vpack.c.b16 %v966, %v965
      %v1026 = vpack.c.b16 %v968, %v967
      %v1027 = vpack.c.b16 %v970, %v969
      %v1028 = vpack.c.b16 %v972, %v971
      %v1029 = vpack.c.b16 %v974, %v973
      %v1030 = vpack.c.b16 %v976, %v975
      %v1031 = vpack.c.b16 %v978, %v977
      %v1032 = vpack.c.b16 %v980, %v979
      %v1033 = vpack.c.b16 %v982, %v981
      %v1034 = vpack.c.b16 %v984, %v983
      %v1035 = vpack.c.b16 %v986, %v985
      %vm1085 = vcmask 130048
      %v1087 = vsel %vm1085, %v693, 0
      %v1090 = vsel %vm1085, %v700, 0
      %v1093 = vsel %vm1085, %v707, 0
      %v1096 = vsel %vm1085, %v714, 0
      %v1099 = vsel %vm1085, %v721, 0
      %v1102 = vsel %vm1085, %v728, 0
      %v1105 = vsel %vm1085, %v735, 0
      %v1108 = vsel %vm1085, %v742, 0
      %1110 = vmatprep.subr.bf16.mxu0 0
      %1111 = vmatpush1.bf16.msra.mxu0 %v994
      %1112 = vmatprep.subr.bf16.mxu0 0
      %1113 = vmatpush1.bf16.msra.mxu0 %v993
      %1114 = vmatprep.subr.bf16.mxu0 0
      %1115 = vmatpush1.bf16.msra.mxu0 %v992
      %1116 = vmatprep.subr.bf16.mxu0 0
      %1117 = vmatpush1.bf16.msra.mxu0 %v991
      %1118 = vmatprep.subr.bf16.mxu0 0
      %1119 = vmatpush1.bf16.msra.mxu0 %v990
      %1120 = vmatprep.subr.bf16.mxu0 0
      %1121 = vmatpush1.bf16.msra.mxu0 %v989
      %1122 = vmatprep.subr.bf16.mxu0 0
      %1123 = vmatpush1.bf16.msra.mxu0 %v988
      %1124 = vmatprep.subr.bf16.mxu0 0
      %1125 = vmatpush1.bf16.msra.mxu0 %v987
      %1126 = vmatprep.subr.bf16.mxu0 0
      %1127 = vmatpush2.bf16.msra.mxu0 %v1002
      %1128 = vmatprep.subr.bf16.mxu0 0
      %1129 = vmatpush2.bf16.msra.mxu0 %v1001
      %1130 = vmatprep.subr.bf16.mxu0 0
      %1131 = vmatpush2.bf16.msra.mxu0 %v1000
      %1132 = vmatprep.subr.bf16.mxu0 0
      %1133 = vmatpush2.bf16.msra.mxu0 %v999
      %1134 = vmatprep.subr.bf16.mxu0 0
      %1135 = vmatpush2.bf16.msra.mxu0 %v998
      %1136 = vmatprep.subr.bf16.mxu0 0
      %1137 = vmatpush2.bf16.msra.mxu0 %v997
      %1138 = vmatprep.subr.bf16.mxu0 0
      %1139 = vmatpush2.bf16.msra.mxu0 %v996
      %1140 = vmatprep.subr.bf16.mxu0 0
      %1141 = vmatpush2.bf16.msra.mxu0 %v995
      %1142 = vmatprep.mubr.bf16.mxu0 %v688
      %1143 = vmatmul.mubr.bf16.gmra.mxu0 %v687
      %v1144 = vpop.f32.mrf.mxu0
      %v1145 = vadd.f32 %v509, %v1144
      %v1146 = vpop.f32.mrf.mxu0
      %v1147 = vpop.f32.mrf.mxu0
      %v1148 = vadd.f32 %v509, %v1147
      %v1149 = vpop.f32.mrf.mxu0
      %1150 = vmatprep.mubr.bf16.mxu0 %v695
      %1151 = vmatmul.mubr.bf16.gmra.mxu0 %v694
      %v1152 = vpop.f32.mrf.mxu0
      %v1153 = vadd.f32 %v509, %v1152
      %v1154 = vpop.f32.mrf.mxu0
      %v1155 = vpop.f32.mrf.mxu0
      %v1156 = vadd.f32 %v509, %v1155
      %v1157 = vpop.f32.mrf.mxu0
      %1158 = vmatprep.mubr.bf16.mxu0 %v702
      %1159 = vmatmul.mubr.bf16.gmra.mxu0 %v701
      %v1160 = vpop.f32.mrf.mxu0
      %v1161 = vadd.f32 %v509, %v1160
      %v1162 = vpop.f32.mrf.mxu0
      %v1163 = vpop.f32.mrf.mxu0
      %v1164 = vadd.f32 %v509, %v1163
      %v1165 = vpop.f32.mrf.mxu0
      %1166 = vmatprep.mubr.bf16.mxu0 %v709
      %1167 = vmatmul.mubr.bf16.gmra.mxu0 %v708
      %v1168 = vpop.f32.mrf.mxu0
      %v1169 = vadd.f32 %v509, %v1168
      %v1170 = vpop.f32.mrf.mxu0
      %v1171 = vpop.f32.mrf.mxu0
      %v1172 = vadd.f32 %v509, %v1171
      %v1173 = vpop.f32.mrf.mxu0
      %1174 = vmatprep.mubr.bf16.mxu0 %v716
      %1175 = vmatmul.mubr.bf16.gmra.mxu0 %v715
      %v1176 = vpop.f32.mrf.mxu0
      %v1177 = vadd.f32 %v509, %v1176
      %v1178 = vpop.f32.mrf.mxu0
      %v1179 = vpop.f32.mrf.mxu0
      %v1180 = vadd.f32 %v509, %v1179
      %v1181 = vpop.f32.mrf.mxu0
      %1182 = vmatprep.mubr.bf16.mxu0 %v723
      %1183 = vmatmul.mubr.bf16.gmra.mxu0 %v722
      %v1184 = vpop.f32.mrf.mxu0
      %v1185 = vadd.f32 %v509, %v1184
      %v1186 = vpop.f32.mrf.mxu0
      %v1187 = vpop.f32.mrf.mxu0
      %v1188 = vadd.f32 %v509, %v1187
      %v1189 = vpop.f32.mrf.mxu0
      %1190 = vmatprep.mubr.bf16.mxu0 %v730
      %1191 = vmatmul.mubr.bf16.gmra.mxu0 %v729
      %v1192 = vpop.f32.mrf.mxu0
      %v1193 = vadd.f32 %v509, %v1192
      %v1194 = vpop.f32.mrf.mxu0
      %v1195 = vpop.f32.mrf.mxu0
      %v1196 = vadd.f32 %v509, %v1195
      %v1197 = vpop.f32.mrf.mxu0
      %1198 = vmatprep.mubr.bf16.mxu0 %v737
      %1199 = vmatmul.mubr.bf16.gmra.mxu0 %v736
      %v1200 = vpop.f32.mrf.mxu0
      %v1201 = vadd.f32 %v509, %v1200
      %v1202 = vpop.f32.mrf.mxu0
      %v1203 = vpop.f32.mrf.mxu0
      %v1204 = vadd.f32 %v509, %v1203
      %v1205 = vpop.f32.mrf.mxu0
      %1206 = vdwg.mxu0
      %1207 = vmatprep.subr.bf16.mxu0 0
      %1208 = vmatpush1.bf16.msra.mxu0 %v1010
      %1209 = vmatprep.subr.bf16.mxu0 0
      %1210 = vmatpush1.bf16.msra.mxu0 %v1009
      %1211 = vmatprep.subr.bf16.mxu0 0
      %1212 = vmatpush1.bf16.msra.mxu0 %v1008
      %1213 = vmatprep.subr.bf16.mxu0 0
      %1214 = vmatpush1.bf16.msra.mxu0 %v1007
      %1215 = vmatprep.subr.bf16.mxu0 0
      %1216 = vmatpush1.bf16.msra.mxu0 %v1006
      %1217 = vmatprep.subr.bf16.mxu0 0
      %1218 = vmatpush1.bf16.msra.mxu0 %v1005
      %1219 = vmatprep.subr.bf16.mxu0 0
      %1220 = vmatpush1.bf16.msra.mxu0 %v1004
      %1221 = vmatprep.subr.bf16.mxu0 0
      %1222 = vmatpush1.bf16.msra.mxu0 %v1003
      %1223 = vmatprep.subr.bf16.mxu0 0
      %1224 = vmatpush2.bf16.msra.mxu0 %v1018
      %1225 = vmatprep.subr.bf16.mxu0 0
      %1226 = vmatpush2.bf16.msra.mxu0 %v1017
      %1227 = vmatprep.subr.bf16.mxu0 0
      %1228 = vmatpush2.bf16.msra.mxu0 %v1016
      %1229 = vmatprep.subr.bf16.mxu0 0
      %1230 = vmatpush2.bf16.msra.mxu0 %v1015
      %1231 = vmatprep.subr.bf16.mxu0 0
      %1232 = vmatpush2.bf16.msra.mxu0 %v1014
      %1233 = vmatprep.subr.bf16.mxu0 0
      %1234 = vmatpush2.bf16.msra.mxu0 %v1013
      %1235 = vmatprep.subr.bf16.mxu0 0
      %1236 = vmatpush2.bf16.msra.mxu0 %v1012
      %1237 = vmatprep.subr.bf16.mxu0 0
      %1238 = vmatpush2.bf16.msra.mxu0 %v1011
      %1239 = vmatprep.mubr.bf16.mxu0 %v690
      %1240 = vmatmul.mubr.bf16.gmra.mxu0 %v689
      %v1241 = vpop.f32.mrf.mxu0
      %v1242 = vadd.f32 %v1145, %v1241
      %v1243 = vpop.f32.mrf.mxu0
      %v1244 = vpop.f32.mrf.mxu0
      %v1245 = vadd.f32 %v1148, %v1244
      %v1246 = vpop.f32.mrf.mxu0
      %1247 = vmatprep.mubr.bf16.mxu0 %v697
      %1248 = vmatmul.mubr.bf16.gmra.mxu0 %v696
      %v1249 = vpop.f32.mrf.mxu0
      %v1250 = vadd.f32 %v1153, %v1249
      %v1251 = vpop.f32.mrf.mxu0
      %v1252 = vpop.f32.mrf.mxu0
      %v1253 = vadd.f32 %v1156, %v1252
      %v1254 = vpop.f32.mrf.mxu0
      %1255 = vmatprep.mubr.bf16.mxu0 %v704
      %1256 = vmatmul.mubr.bf16.gmra.mxu0 %v703
      %v1257 = vpop.f32.mrf.mxu0
      %v1258 = vadd.f32 %v1161, %v1257
      %v1259 = vpop.f32.mrf.mxu0
      %v1260 = vpop.f32.mrf.mxu0
      %v1261 = vadd.f32 %v1164, %v1260
      %v1262 = vpop.f32.mrf.mxu0
      %1263 = vmatprep.mubr.bf16.mxu0 %v711
      %1264 = vmatmul.mubr.bf16.gmra.mxu0 %v710
      %v1265 = vpop.f32.mrf.mxu0
      %v1266 = vadd.f32 %v1169, %v1265
      %v1267 = vpop.f32.mrf.mxu0
      %v1268 = vpop.f32.mrf.mxu0
      %v1269 = vadd.f32 %v1172, %v1268
      %v1270 = vpop.f32.mrf.mxu0
      %1271 = vmatprep.mubr.bf16.mxu0 %v718
      %1272 = vmatmul.mubr.bf16.gmra.mxu0 %v717
      %v1273 = vpop.f32.mrf.mxu0
      %v1274 = vadd.f32 %v1177, %v1273
      %v1275 = vpop.f32.mrf.mxu0
      %v1276 = vpop.f32.mrf.mxu0
      %v1277 = vadd.f32 %v1180, %v1276
      %v1278 = vpop.f32.mrf.mxu0
      %1279 = vmatprep.mubr.bf16.mxu0 %v725
      %1280 = vmatmul.mubr.bf16.gmra.mxu0 %v724
      %v1281 = vpop.f32.mrf.mxu0
      %v1282 = vadd.f32 %v1185, %v1281
      %v1283 = vpop.f32.mrf.mxu0
      %v1284 = vpop.f32.mrf.mxu0
      %v1285 = vadd.f32 %v1188, %v1284
      %v1286 = vpop.f32.mrf.mxu0
      %1287 = vmatprep.mubr.bf16.mxu0 %v732
      %1288 = vmatmul.mubr.bf16.gmra.mxu0 %v731
      %v1289 = vpop.f32.mrf.mxu0
      %v1290 = vadd.f32 %v1193, %v1289
      %v1291 = vpop.f32.mrf.mxu0
      %v1292 = vpop.f32.mrf.mxu0
      %v1293 = vadd.f32 %v1196, %v1292
      %v1294 = vpop.f32.mrf.mxu0
      %1295 = vmatprep.mubr.bf16.mxu0 %v739
      %1296 = vmatmul.mubr.bf16.gmra.mxu0 %v738
      %v1297 = vpop.f32.mrf.mxu0
      %v1298 = vadd.f32 %v1201, %v1297
      %v1299 = vpop.f32.mrf.mxu0
      %v1300 = vpop.f32.mrf.mxu0
      %v1301 = vadd.f32 %v1204, %v1300
      %v1302 = vpop.f32.mrf.mxu0
      %1303 = vdwg.mxu0
      %1304 = vmatprep.subr.bf16.mxu0 0
      %1305 = vmatpush1.bf16.msra.mxu0 %v1026
      %1306 = vmatprep.subr.bf16.mxu0 0
      %1307 = vmatpush1.bf16.msra.mxu0 %v1025
      %1308 = vmatprep.subr.bf16.mxu0 0
      %1309 = vmatpush1.bf16.msra.mxu0 %v1024
      %1310 = vmatprep.subr.bf16.mxu0 0
      %1311 = vmatpush1.bf16.msra.mxu0 %v1023
      %1312 = vmatprep.subr.bf16.mxu0 0
      %1313 = vmatpush1.bf16.msra.mxu0 %v1022
      %1314 = vmatprep.subr.bf16.mxu0 0
      %1315 = vmatpush1.bf16.msra.mxu0 %v1021
      %1316 = vmatprep.subr.bf16.mxu0 0
      %1317 = vmatpush1.bf16.msra.mxu0 %v1020
      %1318 = vmatprep.subr.bf16.mxu0 0
      %1319 = vmatpush1.bf16.msra.mxu0 %v1019
      %1320 = vmatprep.subr.bf16.mxu0 0
      %1321 = vmatpush2.bf16.msra.mxu0 %v1034
      %1322 = vmatprep.subr.bf16.mxu0 0
      %1323 = vmatpush2.bf16.msra.mxu0 %v1033
      %1324 = vmatprep.subr.bf16.mxu0 0
      %1325 = vmatpush2.bf16.msra.mxu0 %v1032
      %1326 = vmatprep.subr.bf16.mxu0 0
      %1327 = vmatpush2.bf16.msra.mxu0 %v1031
      %1328 = vmatprep.subr.bf16.mxu0 0
      %1329 = vmatpush2.bf16.msra.mxu0 %v1030
      %1330 = vmatprep.subr.bf16.mxu0 0
      %1331 = vmatpush2.bf16.msra.mxu0 %v1029
      %1332 = vmatprep.subr.bf16.mxu0 0
      %1333 = vmatpush2.bf16.msra.mxu0 %v1028
      %1334 = vmatprep.subr.bf16.mxu0 0
      %1335 = vmatpush2.bf16.msra.mxu0 %v1027
      %1336 = vmatprep.mubr.bf16.mxu0 %v692
      %1337 = vmatmul.mubr.bf16.gmra.mxu0 %v691
      %v1338 = vpop.f32.mrf.mxu0
      %v1339 = vadd.f32 %v1242, %v1338
      %v1340 = vpop.f32.mrf.mxu0
      %v1341 = vpop.f32.mrf.mxu0
      %v1342 = vadd.f32 %v1245, %v1341
      %v1343 = vpop.f32.mrf.mxu0
      %1344 = vmatprep.mubr.bf16.mxu0 %v699
      %1345 = vmatmul.mubr.bf16.gmra.mxu0 %v698
      %v1346 = vpop.f32.mrf.mxu0
      %v1347 = vadd.f32 %v1250, %v1346
      %v1348 = vpop.f32.mrf.mxu0
      %v1349 = vpop.f32.mrf.mxu0
      %v1350 = vadd.f32 %v1253, %v1349
      %v1351 = vpop.f32.mrf.mxu0
      %1352 = vmatprep.mubr.bf16.mxu0 %v706
      %1353 = vmatmul.mubr.bf16.gmra.mxu0 %v705
      %v1354 = vpop.f32.mrf.mxu0
      %v1355 = vadd.f32 %v1258, %v1354
      %v1356 = vpop.f32.mrf.mxu0
      %v1357 = vpop.f32.mrf.mxu0
      %v1358 = vadd.f32 %v1261, %v1357
      %v1359 = vpop.f32.mrf.mxu0
      %1360 = vmatprep.mubr.bf16.mxu0 %v713
      %1361 = vmatmul.mubr.bf16.gmra.mxu0 %v712
      %v1362 = vpop.f32.mrf.mxu0
      %v1363 = vadd.f32 %v1266, %v1362
      %v1364 = vpop.f32.mrf.mxu0
      %v1365 = vpop.f32.mrf.mxu0
      %v1366 = vadd.f32 %v1269, %v1365
      %v1367 = vpop.f32.mrf.mxu0
      %1368 = vmatprep.mubr.bf16.mxu0 %v720
      %1369 = vmatmul.mubr.bf16.gmra.mxu0 %v719
      %v1370 = vpop.f32.mrf.mxu0
      %v1371 = vadd.f32 %v1274, %v1370
      %v1372 = vpop.f32.mrf.mxu0
      %v1373 = vpop.f32.mrf.mxu0
      %v1374 = vadd.f32 %v1277, %v1373
      %v1375 = vpop.f32.mrf.mxu0
      %1376 = vmatprep.mubr.bf16.mxu0 %v727
      %1377 = vmatmul.mubr.bf16.gmra.mxu0 %v726
      %v1378 = vpop.f32.mrf.mxu0
      %v1379 = vadd.f32 %v1282, %v1378
      %v1380 = vpop.f32.mrf.mxu0
      %v1381 = vpop.f32.mrf.mxu0
      %v1382 = vadd.f32 %v1285, %v1381
      %v1383 = vpop.f32.mrf.mxu0
      %1384 = vmatprep.mubr.bf16.mxu0 %v734
      %1385 = vmatmul.mubr.bf16.gmra.mxu0 %v733
      %v1386 = vpop.f32.mrf.mxu0
      %v1387 = vadd.f32 %v1290, %v1386
      %v1388 = vpop.f32.mrf.mxu0
      %v1389 = vpop.f32.mrf.mxu0
      %v1390 = vadd.f32 %v1293, %v1389
      %v1391 = vpop.f32.mrf.mxu0
      %1392 = vmatprep.mubr.bf16.mxu0 %v741
      %1393 = vmatmul.mubr.bf16.gmra.mxu0 %v740
      %v1394 = vpop.f32.mrf.mxu0
      %v1395 = vadd.f32 %v1298, %v1394
      %v1396 = vpop.f32.mrf.mxu0
      %v1397 = vpop.f32.mrf.mxu0
      %v1398 = vadd.f32 %v1301, %v1397
      %v1399 = vpop.f32.mrf.mxu0
      %1400 = vdwg.mxu0
      %1401 = vmatprep.subr.bf16.mxu0 0
      %1402 = vmatpush1.bf16.msra.mxu0 0
      %1403 = vmatprep.subr.bf16.mxu0 0
      %1404 = vmatpush1.bf16.msra.mxu0 0
      %1405 = vmatprep.subr.bf16.mxu0 0
      %1406 = vmatpush1.bf16.msra.mxu0 0
      %1407 = vmatprep.subr.bf16.mxu0 0
      %1408 = vmatpush1.bf16.msra.mxu0 0
      %1409 = vmatprep.subr.bf16.mxu0 0
      %1410 = vmatpush1.bf16.msra.mxu0 0
      %1411 = vmatprep.subr.bf16.mxu0 0
      %1412 = vmatpush1.bf16.msra.mxu0 0
      %1413 = vmatprep.subr.bf16.mxu0 0
      %1414 = vmatpush1.bf16.msra.mxu0 0
      %1415 = vmatprep.subr.bf16.mxu0 0
      %1416 = vmatpush1.bf16.msra.mxu0 %v1035
      %1417 = vmatprep.subr.bf16.mxu0 0
      %1418 = vmatpush2.bf16.msra.mxu0 0
      %1419 = vmatprep.subr.bf16.mxu0 0
      %1420 = vmatpush2.bf16.msra.mxu0 0
      %1421 = vmatprep.subr.bf16.mxu0 0
      %1422 = vmatpush2.bf16.msra.mxu0 0
      %1423 = vmatprep.subr.bf16.mxu0 0
      %1424 = vmatpush2.bf16.msra.mxu0 0
      %1425 = vmatprep.subr.bf16.mxu0 0
      %1426 = vmatpush2.bf16.msra.mxu0 0
      %1427 = vmatprep.subr.bf16.mxu0 0
      %1428 = vmatpush2.bf16.msra.mxu0 0
      %1429 = vmatprep.subr.bf16.mxu0 0
      %1430 = vmatpush2.bf16.msra.mxu0 0
      %1431 = vmatprep.subr.bf16.mxu0 0
      %1432 = vmatpush2.bf16.msra.mxu0 0
      %1433 = vmatprep.mubr.bf16.mxu0 0
      %1434 = vmatmul.mubr.bf16.gmra.mxu0 %v1087
      %v1435 = vpop.f32.mrf.mxu0
      %v1436 = vadd.f32 %v1339, %v1435
      %v1437 = vpop.f32.mrf.mxu0
      %v1438 = vpop.f32.mrf.mxu0
      %v1439 = vadd.f32 %v1342, %v1438
      %v1440 = vpop.f32.mrf.mxu0
      %1441 = vmatprep.mubr.bf16.mxu0 0
      %1442 = vmatmul.mubr.bf16.gmra.mxu0 %v1090
      %v1443 = vpop.f32.mrf.mxu0
      %v1444 = vadd.f32 %v1347, %v1443
      %v1445 = vpop.f32.mrf.mxu0
      %v1446 = vpop.f32.mrf.mxu0
      %v1447 = vadd.f32 %v1350, %v1446
      %v1448 = vpop.f32.mrf.mxu0
      %1449 = vmatprep.mubr.bf16.mxu0 0
      %1450 = vmatmul.mubr.bf16.gmra.mxu0 %v1093
      %v1451 = vpop.f32.mrf.mxu0
      %v1452 = vadd.f32 %v1355, %v1451
      %v1453 = vpop.f32.mrf.mxu0
      %v1454 = vpop.f32.mrf.mxu0
      %v1455 = vadd.f32 %v1358, %v1454
      %v1456 = vpop.f32.mrf.mxu0
      %1457 = vmatprep.mubr.bf16.mxu0 0
      %1458 = vmatmul.mubr.bf16.gmra.mxu0 %v1096
      %v1459 = vpop.f32.mrf.mxu0
      %v1460 = vadd.f32 %v1363, %v1459
      %v1461 = vpop.f32.mrf.mxu0
      %v1462 = vpop.f32.mrf.mxu0
      %v1463 = vadd.f32 %v1366, %v1462
      %v1464 = vpop.f32.mrf.mxu0
      %1465 = vmatprep.mubr.bf16.mxu0 0
      %1466 = vmatmul.mubr.bf16.gmra.mxu0 %v1099
      %v1467 = vpop.f32.mrf.mxu0
      %v1468 = vadd.f32 %v1371, %v1467
      %v1469 = vpop.f32.mrf.mxu0
      %v1470 = vpop.f32.mrf.mxu0
      %v1471 = vadd.f32 %v1374, %v1470
      %v1472 = vpop.f32.mrf.mxu0
      %1473 = vmatprep.mubr.bf16.mxu0 0
      %1474 = vmatmul.mubr.bf16.gmra.mxu0 %v1102
      %v1475 = vpop.f32.mrf.mxu0
      %v1476 = vadd.f32 %v1379, %v1475
      %v1477 = vpop.f32.mrf.mxu0
      %v1478 = vpop.f32.mrf.mxu0
      %v1479 = vadd.f32 %v1382, %v1478
      %v1480 = vpop.f32.mrf.mxu0
      %1481 = vmatprep.mubr.bf16.mxu0 0
      %1482 = vmatmul.mubr.bf16.gmra.mxu0 %v1105
      %v1483 = vpop.f32.mrf.mxu0
      %v1484 = vadd.f32 %v1387, %v1483
      %v1485 = vpop.f32.mrf.mxu0
      %v1486 = vpop.f32.mrf.mxu0
      %v1487 = vadd.f32 %v1390, %v1486
      %v1488 = vpop.f32.mrf.mxu0
      %1489 = vmatprep.mubr.bf16.mxu0 0
      %1490 = vmatmul.mubr.bf16.gmra.mxu0 %v1108
      %v1491 = vpop.f32.mrf.mxu0
      %v1492 = vadd.f32 %v1395, %v1491
      %v1493 = vpop.f32.mrf.mxu0
      %v1494 = vpop.f32.mrf.mxu0
      %v1495 = vadd.f32 %v1398, %v1494
      %v1496 = vpop.f32.mrf.mxu0
      %1497 = vdwg.mxu0
      %v1498 = vmax.f32 %v1436, 0.0
      %v1499 = vmax.f32 %v1439, 0.0
      %v1500 = vmax.f32 %v1444, 0.0
      %v1501 = vmax.f32 %v1447, 0.0
      %v1502 = vmax.f32 %v1452, 0.0
      %v1503 = vmax.f32 %v1455, 0.0
      %v1504 = vmax.f32 %v1460, 0.0
      %v1505 = vmax.f32 %v1463, 0.0
      %v1506 = vmax.f32 %v1468, 0.0
      %v1507 = vmax.f32 %v1471, 0.0
      %v1508 = vmax.f32 %v1476, 0.0
      %v1509 = vmax.f32 %v1479, 0.0
      %v1510 = vmax.f32 %v1484, 0.0
      %v1511 = vmax.f32 %v1487, 0.0
      %v1512 = vmax.f32 %v1492, 0.0
      %v1513 = vmax.f32 %v1495, 0.0
      %v1514 = vpack.c.bf16 %v1499, %v1498
      %v1515 = vpack.c.bf16 %v1501, %v1500
      %v1516 = vpack.c.bf16 %v1503, %v1502
      %v1517 = vpack.c.bf16 %v1505, %v1504
      %v1518 = vpack.c.bf16 %v1507, %v1506
      %v1519 = vpack.c.bf16 %v1509, %v1508
      %v1520 = vpack.c.bf16 %v1511, %v1510
      %v1521 = vpack.c.bf16 %v1513, %v1512
      %v1522 = vld [vmem:[%s3] sm:$0xf]
      %v1523 = vld [vmem:[%s3 + $0x4] sm:$0xf]
      %v1524 = vld [vmem:[%s3 + $0x8] sm:$0xf]
      %v1525 = vld [vmem:[%s3 + $0xc] sm:$0xf]
      %v1526 = vld [vmem:[%s3 + $0x10] sm:$0xf]
      %v1527 = vld [vmem:[%s3 + $0x14] sm:$0xf]
      %v1528 = vld [vmem:[%s3 + $0x18] sm:$0xf]
      %v1529 = vld [vmem:[%s3 + $0x1c] sm:$0xf]
      %v1530 = vld [vmem:[%s3 + $0x20] sm:$0xf]
      %v1531 = vld [vmem:[%s3 + $0x24] sm:$0xf]
      %v1532 = vld [vmem:[%s3 + $0x28] sm:$0xf]
      %v1533 = vld [vmem:[%s3 + $0x2c] sm:$0xf]
      %v1534 = vld [vmem:[%s3 + $0x30] sm:$0xf]
      %v1535 = vld [vmem:[%s3 + $0x34] sm:$0xf]
      %v1536 = vld [vmem:[%s3 + $0x38] sm:$0xf]
      %v1537 = vld [vmem:[%s3 + $0x3c] sm:$0xf]
      %v1538 = vld [vmem:[%s4] sm:$0x1]
      %v1540 = vlaneseq
      %v1541 = vshrl.u32 %v1540, 7
      %v1542 = vsub.s32 0, %v1541
      %v1543 = vrot.slane %v1538, %v1542
      %v1561 = vunpack.c.l.b16 %v1522
      %v1562 = vunpack.c.l.b16 %v1523
      %v1563 = vunpack.c.l.b16 %v1524
      %v1564 = vunpack.c.l.b16 %v1525
      %v1565 = vunpack.c.l.b16 %v1526
      %v1566 = vunpack.c.l.b16 %v1527
      %v1567 = vunpack.c.l.b16 %v1528
      %v1568 = vunpack.c.l.b16 %v1529
      %v1569 = vunpack.c.l.b16 %v1530
      %v1570 = vunpack.c.l.b16 %v1531
      %v1571 = vunpack.c.l.b16 %v1532
      %v1572 = vunpack.c.l.b16 %v1533
      %v1573 = vunpack.c.l.b16 %v1534
      %v1574 = vunpack.c.l.b16 %v1535
      %v1575 = vunpack.c.l.b16 %v1536
      %v1576 = vunpack.c.l.b16 %v1537
      %v1577 = vpack.c.b16 %v1562, %v1561
      %v1578 = vpack.c.b16 %v1564, %v1563
      %v1579 = vpack.c.b16 %v1566, %v1565
      %v1580 = vpack.c.b16 %v1568, %v1567
      %v1581 = vpack.c.b16 %v1570, %v1569
      %v1582 = vpack.c.b16 %v1572, %v1571
      %v1583 = vpack.c.b16 %v1574, %v1573
      %v1584 = vpack.c.b16 %v1576, %v1575
      %1593 = vmatprep.subr.bf16.mxu0 0
      %1594 = vmatpush1.bf16.msra.mxu0 %v1584
      %1595 = vmatprep.subr.bf16.mxu0 0
      %1596 = vmatpush1.bf16.msra.mxu0 %v1583
      %1597 = vmatprep.subr.bf16.mxu0 0
      %1598 = vmatpush1.bf16.msra.mxu0 %v1582
      %1599 = vmatprep.subr.bf16.mxu0 0
      %1600 = vmatpush1.bf16.msra.mxu0 %v1581
      %1601 = vmatprep.subr.bf16.mxu0 0
      %1602 = vmatpush1.bf16.msra.mxu0 %v1580
      %1603 = vmatprep.subr.bf16.mxu0 0
      %1604 = vmatpush1.bf16.msra.mxu0 %v1579
      %1605 = vmatprep.subr.bf16.mxu0 0
      %1606 = vmatpush1.bf16.msra.mxu0 %v1578
      %1607 = vmatprep.subr.bf16.mxu0 0
      %1608 = vmatpush1.bf16.msra.mxu0 %v1577
      %1609 = vmatprep.subr.bf16.mxu0 0
      %1610 = vmatpush2.bf16.msra.mxu0 0
      %1611 = vmatprep.subr.bf16.mxu0 0
      %1612 = vmatpush2.bf16.msra.mxu0 0
      %1613 = vmatprep.subr.bf16.mxu0 0
      %1614 = vmatpush2.bf16.msra.mxu0 0
      %1615 = vmatprep.subr.bf16.mxu0 0
      %1616 = vmatpush2.bf16.msra.mxu0 0
      %1617 = vmatprep.subr.bf16.mxu0 0
      %1618 = vmatpush2.bf16.msra.mxu0 0
      %1619 = vmatprep.subr.bf16.mxu0 0
      %1620 = vmatpush2.bf16.msra.mxu0 0
      %1621 = vmatprep.subr.bf16.mxu0 0
      %1622 = vmatpush2.bf16.msra.mxu0 0
      %1623 = vmatprep.subr.bf16.mxu0 0
      %1624 = vmatpush2.bf16.msra.mxu0 0
      %1625 = vmatprep.mubr.bf16.mxu0 0
      %1626 = vmatmul.mubr.bf16.gmra.mxu0 %v1514
      %v1627 = vpop.f32.mrf.mxu0
      %v1628 = vadd.f32 %v1543, %v1627
      %v1629 = vpop.f32.mrf.mxu0
      %v1630 = vpop.f32.mrf.mxu0
      %v1631 = vadd.f32 %v1543, %v1630
      %v1632 = vpop.f32.mrf.mxu0
      %1633 = vmatprep.mubr.bf16.mxu0 0
      %1634 = vmatmul.mubr.bf16.gmra.mxu0 %v1515
      %v1635 = vpop.f32.mrf.mxu0
      %v1636 = vadd.f32 %v1543, %v1635
      %v1637 = vpop.f32.mrf.mxu0
      %v1638 = vpop.f32.mrf.mxu0
      %v1639 = vadd.f32 %v1543, %v1638
      %v1640 = vpop.f32.mrf.mxu0
      %1641 = vmatprep.mubr.bf16.mxu0 0
      %1642 = vmatmul.mubr.bf16.gmra.mxu0 %v1516
      %v1643 = vpop.f32.mrf.mxu0
      %v1644 = vadd.f32 %v1543, %v1643
      %v1645 = vpop.f32.mrf.mxu0
      %v1646 = vpop.f32.mrf.mxu0
      %v1647 = vadd.f32 %v1543, %v1646
      %v1648 = vpop.f32.mrf.mxu0
      %1649 = vmatprep.mubr.bf16.mxu0 0
      %1650 = vmatmul.mubr.bf16.gmra.mxu0 %v1517
      %v1651 = vpop.f32.mrf.mxu0
      %v1652 = vadd.f32 %v1543, %v1651
      %v1653 = vpop.f32.mrf.mxu0
      %v1654 = vpop.f32.mrf.mxu0
      %v1655 = vadd.f32 %v1543, %v1654
      %v1656 = vpop.f32.mrf.mxu0
      %1657 = vmatprep.mubr.bf16.mxu0 0
      %1658 = vmatmul.mubr.bf16.gmra.mxu0 %v1518
      %v1659 = vpop.f32.mrf.mxu0
      %v1660 = vadd.f32 %v1543, %v1659
      %v1661 = vpop.f32.mrf.mxu0
      %v1662 = vpop.f32.mrf.mxu0
      %v1663 = vadd.f32 %v1543, %v1662
      %v1664 = vpop.f32.mrf.mxu0
      %1665 = vmatprep.mubr.bf16.mxu0 0
      %1666 = vmatmul.mubr.bf16.gmra.mxu0 %v1519
      %v1667 = vpop.f32.mrf.mxu0
      %v1668 = vadd.f32 %v1543, %v1667
      %v1669 = vpop.f32.mrf.mxu0
      %v1670 = vpop.f32.mrf.mxu0
      %v1671 = vadd.f32 %v1543, %v1670
      %v1672 = vpop.f32.mrf.mxu0
      %1673 = vmatprep.mubr.bf16.mxu0 0
      %1674 = vmatmul.mubr.bf16.gmra.mxu0 %v1520
      %v1675 = vpop.f32.mrf.mxu0
      %v1676 = vadd.f32 %v1543, %v1675
      %v1677 = vpop.f32.mrf.mxu0
      %v1678 = vpop.f32.mrf.mxu0
      %v1679 = vadd.f32 %v1543, %v1678
      %v1680 = vpop.f32.mrf.mxu0
      %1681 = vmatprep.mubr.bf16.mxu0 0
      %1682 = vmatmul.mubr.bf16.gmra.mxu0 %v1521
      %v1683 = vpop.f32.mrf.mxu0
      %v1684 = vadd.f32 %v1543, %v1683
      %v1685 = vpop.f32.mrf.mxu0
      %v1686 = vpop.f32.mrf.mxu0
      %v1687 = vadd.f32 %v1543, %v1686
      %v1688 = vpop.f32.mrf.mxu0
      %1689 = vdwg.mxu0
      %v1690 = vmax.f32 %v1628, 0.0
      %v1691 = vmax.f32 %v1631, 0.0
      %v1692 = vmax.f32 %v1636, 0.0
      %v1693 = vmax.f32 %v1639, 0.0
      %v1694 = vmax.f32 %v1644, 0.0
      %v1695 = vmax.f32 %v1647, 0.0
      %v1696 = vmax.f32 %v1652, 0.0
      %v1697 = vmax.f32 %v1655, 0.0
      %v1698 = vmax.f32 %v1660, 0.0
      %v1699 = vmax.f32 %v1663, 0.0
      %v1700 = vmax.f32 %v1668, 0.0
      %v1701 = vmax.f32 %v1671, 0.0
      %v1702 = vmax.f32 %v1676, 0.0
      %v1703 = vmax.f32 %v1679, 0.0
      %v1704 = vmax.f32 %v1684, 0.0
      %v1705 = vmax.f32 %v1687, 0.0
      %v1706 = vpack.c.bf16 %v1691, %v1690
      %v1707 = vpack.c.bf16 %v1693, %v1692
      %v1708 = vpack.c.bf16 %v1695, %v1694
      %v1709 = vpack.c.bf16 %v1697, %v1696
      %v1710 = vpack.c.bf16 %v1699, %v1698
      %v1711 = vpack.c.bf16 %v1701, %v1700
      %v1712 = vpack.c.bf16 %v1703, %v1702
      %v1713 = vpack.c.bf16 %v1705, %v1704
      %v1714 = vld [vmem:[%s5] sm:$0xf]
      %v1715 = vld [vmem:[%s5 + $0x4] sm:$0xf]
      %v1716 = vld [vmem:[%s5 + $0x8] sm:$0xf]
      %v1717 = vld [vmem:[%s5 + $0xc] sm:$0xf]
      %v1718 = vld [vmem:[%s5 + $0x10] sm:$0xf]
      %v1719 = vld [vmem:[%s5 + $0x14] sm:$0xf]
      %v1720 = vld [vmem:[%s5 + $0x18] sm:$0xf]
      %v1721 = vld [vmem:[%s5 + $0x1c] sm:$0xf]
      %v1722 = vld [vmem:[%s5 + $0x20] sm:$0xf]
      %v1723 = vld [vmem:[%s5 + $0x24] sm:$0xf]
      %v1724 = vld [vmem:[%s5 + $0x28] sm:$0xf]
      %v1725 = vld [vmem:[%s5 + $0x2c] sm:$0xf]
      %v1726 = vld [vmem:[%s5 + $0x30] sm:$0xf]
      %v1727 = vld [vmem:[%s5 + $0x34] sm:$0xf]
      %v1728 = vld [vmem:[%s5 + $0x38] sm:$0xf]
      %v1729 = vld [vmem:[%s5 + $0x3c] sm:$0xf]
      %v1730 = vld [vmem:[%s6] sm:$0x1]
      %v1732 = vlaneseq
      %v1733 = vshrl.u32 %v1732, 7
      %v1734 = vsub.s32 0, %v1733
      %v1735 = vrot.slane %v1730, %v1734
      %v1753 = vunpack.c.l.b16 %v1714
      %v1754 = vunpack.c.l.b16 %v1715
      %v1755 = vunpack.c.l.b16 %v1716
      %v1756 = vunpack.c.l.b16 %v1717
      %v1757 = vunpack.c.l.b16 %v1718
      %v1758 = vunpack.c.l.b16 %v1719
      %v1759 = vunpack.c.l.b16 %v1720
      %v1760 = vunpack.c.l.b16 %v1721
      %v1761 = vunpack.c.l.b16 %v1722
      %v1762 = vunpack.c.l.b16 %v1723
      %v1763 = vunpack.c.l.b16 %v1724
      %v1764 = vunpack.c.l.b16 %v1725
      %v1765 = vunpack.c.l.b16 %v1726
      %v1766 = vunpack.c.l.b16 %v1727
      %v1767 = vunpack.c.l.b16 %v1728
      %v1768 = vunpack.c.l.b16 %v1729
      %v1769 = vpack.c.b16 %v1754, %v1753
      %v1770 = vpack.c.b16 %v1756, %v1755
      %v1771 = vpack.c.b16 %v1758, %v1757
      %v1772 = vpack.c.b16 %v1760, %v1759
      %v1773 = vpack.c.b16 %v1762, %v1761
      %v1774 = vpack.c.b16 %v1764, %v1763
      %v1775 = vpack.c.b16 %v1766, %v1765
      %v1776 = vpack.c.b16 %v1768, %v1767
      %1785 = vmatprep.subr.bf16.mxu0 0
      %1786 = vmatpush1.bf16.msra.mxu0 %v1776
      %1787 = vmatprep.subr.bf16.mxu0 0
      %1788 = vmatpush1.bf16.msra.mxu0 %v1775
      %1789 = vmatprep.subr.bf16.mxu0 0
      %1790 = vmatpush1.bf16.msra.mxu0 %v1774
      %1791 = vmatprep.subr.bf16.mxu0 0
      %1792 = vmatpush1.bf16.msra.mxu0 %v1773
      %1793 = vmatprep.subr.bf16.mxu0 0
      %1794 = vmatpush1.bf16.msra.mxu0 %v1772
      %1795 = vmatprep.subr.bf16.mxu0 0
      %1796 = vmatpush1.bf16.msra.mxu0 %v1771
      %1797 = vmatprep.subr.bf16.mxu0 0
      %1798 = vmatpush1.bf16.msra.mxu0 %v1770
      %1799 = vmatprep.subr.bf16.mxu0 0
      %1800 = vmatpush1.bf16.msra.mxu0 %v1769
      %1801 = vmatprep.subr.bf16.mxu0 0
      %1802 = vmatpush2.bf16.msra.mxu0 0
      %1803 = vmatprep.subr.bf16.mxu0 0
      %1804 = vmatpush2.bf16.msra.mxu0 0
      %1805 = vmatprep.subr.bf16.mxu0 0
      %1806 = vmatpush2.bf16.msra.mxu0 0
      %1807 = vmatprep.subr.bf16.mxu0 0
      %1808 = vmatpush2.bf16.msra.mxu0 0
      %1809 = vmatprep.subr.bf16.mxu0 0
      %1810 = vmatpush2.bf16.msra.mxu0 0
      %1811 = vmatprep.subr.bf16.mxu0 0
      %1812 = vmatpush2.bf16.msra.mxu0 0
      %1813 = vmatprep.subr.bf16.mxu0 0
      %1814 = vmatpush2.bf16.msra.mxu0 0
      %1815 = vmatprep.subr.bf16.mxu0 0
      %1816 = vmatpush2.bf16.msra.mxu0 0
      %1817 = vmatprep.mubr.bf16.mxu0 0
      %1818 = vmatmul.mubr.bf16.gmra.mxu0 %v1706
      %v1819 = vpop.f32.mrf.mxu0
      %v1820 = vadd.f32 %v1735, %v1819
      %v1821 = vpop.f32.mrf.mxu0
      %v1822 = vpop.f32.mrf.mxu0
      %v1823 = vadd.f32 %v1735, %v1822
      %v1824 = vpop.f32.mrf.mxu0
      %1825 = vmatprep.mubr.bf16.mxu0 0
      %1826 = vmatmul.mubr.bf16.gmra.mxu0 %v1707
      %v1827 = vpop.f32.mrf.mxu0
      %v1828 = vadd.f32 %v1735, %v1827
      %v1829 = vpop.f32.mrf.mxu0
      %v1830 = vpop.f32.mrf.mxu0
      %v1831 = vadd.f32 %v1735, %v1830
      %v1832 = vpop.f32.mrf.mxu0
      %1833 = vmatprep.mubr.bf16.mxu0 0
      %1834 = vmatmul.mubr.bf16.gmra.mxu0 %v1708
      %v1835 = vpop.f32.mrf.mxu0
      %v1836 = vadd.f32 %v1735, %v1835
      %v1837 = vpop.f32.mrf.mxu0
      %v1838 = vpop.f32.mrf.mxu0
      %v1839 = vadd.f32 %v1735, %v1838
      %v1840 = vpop.f32.mrf.mxu0
      %1841 = vmatprep.mubr.bf16.mxu0 0
      %1842 = vmatmul.mubr.bf16.gmra.mxu0 %v1709
      %v1843 = vpop.f32.mrf.mxu0
      %v1844 = vadd.f32 %v1735, %v1843
      %v1845 = vpop.f32.mrf.mxu0
      %v1846 = vpop.f32.mrf.mxu0
      %v1847 = vadd.f32 %v1735, %v1846
      %v1848 = vpop.f32.mrf.mxu0
      %1849 = vmatprep.mubr.bf16.mxu0 0
      %1850 = vmatmul.mubr.bf16.gmra.mxu0 %v1710
      %v1851 = vpop.f32.mrf.mxu0
      %v1852 = vadd.f32 %v1735, %v1851
      %v1853 = vpop.f32.mrf.mxu0
      %v1854 = vpop.f32.mrf.mxu0
      %v1855 = vadd.f32 %v1735, %v1854
      %v1856 = vpop.f32.mrf.mxu0
      %1857 = vmatprep.mubr.bf16.mxu0 0
      %1858 = vmatmul.mubr.bf16.gmra.mxu0 %v1711
      %v1859 = vpop.f32.mrf.mxu0
      %v1860 = vadd.f32 %v1735, %v1859
      %v1861 = vpop.f32.mrf.mxu0
      %v1862 = vpop.f32.mrf.mxu0
      %v1863 = vadd.f32 %v1735, %v1862
      %v1864 = vpop.f32.mrf.mxu0
      %1865 = vmatprep.mubr.bf16.mxu0 0
      %1866 = vmatmul.mubr.bf16.gmra.mxu0 %v1712
      %v1867 = vpop.f32.mrf.mxu0
      %v1868 = vadd.f32 %v1735, %v1867
      %v1869 = vpop.f32.mrf.mxu0
      %v1870 = vpop.f32.mrf.mxu0
      %v1871 = vadd.f32 %v1735, %v1870
      %v1872 = vpop.f32.mrf.mxu0
      %1873 = vmatprep.mubr.bf16.mxu0 0
      %1874 = vmatmul.mubr.bf16.gmra.mxu0 %v1713
      %v1875 = vpop.f32.mrf.mxu0
      %v1876 = vadd.f32 %v1735, %v1875
      %v1877 = vpop.f32.mrf.mxu0
      %v1878 = vpop.f32.mrf.mxu0
      %v1879 = vadd.f32 %v1735, %v1878
      %v1880 = vpop.f32.mrf.mxu0
      %1881 = vdwg.mxu0
      %v1882 = vmax.f32 %v1820, 0.0
      %v1883 = vmax.f32 %v1823, 0.0
      %v1884 = vmax.f32 %v1828, 0.0
      %v1885 = vmax.f32 %v1831, 0.0
      %v1886 = vmax.f32 %v1836, 0.0
      %v1887 = vmax.f32 %v1839, 0.0
      %v1888 = vmax.f32 %v1844, 0.0
      %v1889 = vmax.f32 %v1847, 0.0
      %v1890 = vmax.f32 %v1852, 0.0
      %v1891 = vmax.f32 %v1855, 0.0
      %v1892 = vmax.f32 %v1860, 0.0
      %v1893 = vmax.f32 %v1863, 0.0
      %v1894 = vmax.f32 %v1868, 0.0
      %v1895 = vmax.f32 %v1871, 0.0
      %v1896 = vmax.f32 %v1876, 0.0
      %v1897 = vmax.f32 %v1879, 0.0
      %v1898 = vpack.c.bf16 %v1883, %v1882
      %v1899 = vpack.c.bf16 %v1885, %v1884
      %v1900 = vpack.c.bf16 %v1887, %v1886
      %v1901 = vpack.c.bf16 %v1889, %v1888
      %v1902 = vpack.c.bf16 %v1891, %v1890
      %v1903 = vpack.c.bf16 %v1893, %v1892
      %v1904 = vpack.c.bf16 %v1895, %v1894
      %v1905 = vpack.c.bf16 %v1897, %v1896
      %v1906 = vld [vmem:[%s7] sm:$0xff]
      %v1907 = vld [vmem:[%s7 + $0x8] sm:$0xff]
      %v1908 = vld [vmem:[%s7 + $0x10] sm:$0xff]
      %v1909 = vld [vmem:[%s7 + $0x18] sm:$0xf]
      %v1910 = vld [vmem:[%s7 + $0x1c] sm:$0xff]
      %v1911 = vld [vmem:[%s7 + $0x24] sm:$0xff]
      %v1912 = vld [vmem:[%s7 + $0x2c] sm:$0xff]
      %v1913 = vld [vmem:[%s7 + $0x34] sm:$0xf]
      %v1914 = vld [vmem:[%s7 + $0x38] sm:$0xff]
      %v1915 = vld [vmem:[%s7 + $0x40] sm:$0xff]
      %v1916 = vld [vmem:[%s7 + $0x48] sm:$0xff]
      %v1917 = vld [vmem:[%s7 + $0x50] sm:$0xf]
      %v1918 = vld [vmem:[%s7 + $0x54] sm:$0xff]
      %v1919 = vld [vmem:[%s7 + $0x5c] sm:$0xff]
      %v1920 = vld [vmem:[%s7 + $0x64] sm:$0xff]
      %v1921 = vld [vmem:[%s7 + $0x6c] sm:$0xf]
      %v1922 = vld [vmem:[%s7 + $0x70] sm:$0xff]
      %v1923 = vld [vmem:[%s7 + $0x78] sm:$0xff]
      %v1924 = vld [vmem:[%s7 + $0x80] sm:$0xff]
      %v1925 = vld [vmem:[%s7 + $0x88] sm:$0xf]
      %v1926 = vld [vmem:[%s7 + $0x8c] sm:$0xff]
      %v1927 = vld [vmem:[%s7 + $0x94] sm:$0xff]
      %v1928 = vld [vmem:[%s7 + $0x9c] sm:$0xff]
      %v1929 = vld [vmem:[%s7 + $0xa4] sm:$0xf]
      %v1930 = vld [vmem:[%s7 + $0xa8] sm:$0xff]
      %v1931 = vld [vmem:[%s7 + $0xb0] sm:$0xff]
      %v1932 = vld [vmem:[%s7 + $0xb8] sm:$0xff]
      %v1933 = vld [vmem:[%s7 + $0xc0] sm:$0xf]
      %v1934 = vld [vmem:[%s7 + $0xc4] sm:$0xff]
      %v1935 = vld [vmem:[%s7 + $0xcc] sm:$0xff]
      %v1936 = vld [vmem:[%s7 + $0xd4] sm:$0xff]
      %v1937 = vld [vmem:[%s7 + $0xdc] sm:$0xf]
      %v1938 = vld [vmem:[%s7 + $0xe0] sm:$0xff]
      %v1939 = vld [vmem:[%s7 + $0xe8] sm:$0xff]
      %v1940 = vld [vmem:[%s7 + $0xf0] sm:$0xff]
      %v1941 = vld [vmem:[%s7 + $0xf8] sm:$0xf]
      %v1942 = vld [vmem:[%s7 + $0xfc] sm:$0xff]
      %v1943 = vld [vmem:[%s7 + $0x104] sm:$0xff]
      %v1944 = vld [vmem:[%s7 + $0x10c] sm:$0xff]
      %v1945 = vld [vmem:[%s7 + $0x114] sm:$0xf]
      %v1946 = vld [vmem:[%s7 + $0x118] sm:$0xff]
      %v1947 = vld [vmem:[%s7 + $0x120] sm:$0xff]
      %v1948 = vld [vmem:[%s7 + $0x128] sm:$0xff]
      %v1949 = vld [vmem:[%s7 + $0x130] sm:$0xf]
      %v1950 = vld [vmem:[%s7 + $0x134] sm:$0xff]
      %v1951 = vld [vmem:[%s7 + $0x13c] sm:$0xff]
      %v1952 = vld [vmem:[%s7 + $0x144] sm:$0xff]
      %v1953 = vld [vmem:[%s7 + $0x14c] sm:$0xf]
      %v1954 = vld [vmem:[%s7 + $0x150] sm:$0xff]
      %v1955 = vld [vmem:[%s7 + $0x158] sm:$0xff]
      %v1956 = vld [vmem:[%s7 + $0x160] sm:$0xff]
      %v1957 = vld [vmem:[%s7 + $0x168] sm:$0xf]
      %v1958 = vld [vmem:[%s7 + $0x16c] sm:$0xff]
      %v1959 = vld [vmem:[%s7 + $0x174] sm:$0xff]
      %v1960 = vld [vmem:[%s7 + $0x17c] sm:$0xff]
      %v1961 = vld [vmem:[%s7 + $0x184] sm:$0xf]
      %v1962 = vld [vmem:[%s7 + $0x188] sm:$0xff]
      %v1963 = vld [vmem:[%s7 + $0x190] sm:$0xff]
      %v1964 = vld [vmem:[%s7 + $0x198] sm:$0xff]
      %v1965 = vld [vmem:[%s7 + $0x1a0] sm:$0xf]
      %v1966 = vld [vmem:[%s7 + $0x1a4] sm:$0xff]
      %v1967 = vld [vmem:[%s7 + $0x1ac] sm:$0xff]
      %v1968 = vld [vmem:[%s7 + $0x1b4] sm:$0xff]
      %v1969 = vld [vmem:[%s7 + $0x1bc] sm:$0xf]
      %v1970 = vld [vmem:[%s8] sm:$0x7f]
      %v1972 = vlaneseq
      %v1973 = vshrl.u32 %v1972, 7
      %v1974 = vsub.s32 0, %v1973
      %v1975 = vrot.slane %v1970, %v1974
      %v1976 = vlaneseq
      %v1977 = vshrl.u32 %v1976, 7
      %v1978 = vsub.s32 1, %v1977
      %v1979 = vrot.slane %v1970, %v1978
      %v1980 = vlaneseq
      %v1981 = vshrl.u32 %v1980, 7
      %v1982 = vsub.s32 2, %v1981
      %v1983 = vrot.slane %v1970, %v1982
      %v1984 = vlaneseq
      %v1985 = vshrl.u32 %v1984, 7
      %v1986 = vsub.s32 3, %v1985
      %v1987 = vrot.slane %v1970, %v1986
      %v1988 = vlaneseq
      %v1989 = vshrl.u32 %v1988, 7
      %v1990 = vsub.s32 4, %v1989
      %v1991 = vrot.slane %v1970, %v1990
      %v1992 = vlaneseq
      %v1993 = vshrl.u32 %v1992, 7
      %v1994 = vsub.s32 5, %v1993
      %v1995 = vrot.slane %v1970, %v1994
      %v1996 = vlaneseq
      %v1997 = vshrl.u32 %v1996, 7
      %v1998 = vsub.s32 6, %v1997
      %v1999 = vrot.slane %v1970, %v1998
      %v2071 = vunpack.c.l.b16 %v1906
      %v2072 = vunpack.c.h.b16 %v1906
      %v2073 = vunpack.c.l.b16 %v1907
      %v2074 = vunpack.c.h.b16 %v1907
      %v2075 = vunpack.c.l.b16 %v1908
      %v2076 = vunpack.c.h.b16 %v1908
      %v2077 = vunpack.c.l.b16 %v1909
      %v2078 = vunpack.c.l.b16 %v1910
      %v2079 = vunpack.c.h.b16 %v1910
      %v2080 = vunpack.c.l.b16 %v1911
      %v2081 = vunpack.c.h.b16 %v1911
      %v2082 = vunpack.c.l.b16 %v1912
      %v2083 = vunpack.c.h.b16 %v1912
      %v2084 = vunpack.c.l.b16 %v1913
      %v2085 = vunpack.c.l.b16 %v1914
      %v2086 = vunpack.c.h.b16 %v1914
      %v2087 = vunpack.c.l.b16 %v1915
      %v2088 = vunpack.c.h.b16 %v1915
      %v2089 = vunpack.c.l.b16 %v1916
      %v2090 = vunpack.c.h.b16 %v1916
      %v2091 = vunpack.c.l.b16 %v1917
      %v2092 = vunpack.c.l.b16 %v1918
      %v2093 = vunpack.c.h.b16 %v1918
      %v2094 = vunpack.c.l.b16 %v1919
      %v2095 = vunpack.c.h.b16 %v1919
      %v2096 = vunpack.c.l.b16 %v1920
      %v2097 = vunpack.c.h.b16 %v1920
      %v2098 = vunpack.c.l.b16 %v1921
      %v2099 = vunpack.c.l.b16 %v1922
      %v2100 = vunpack.c.h.b16 %v1922
      %v2101 = vunpack.c.l.b16 %v1923
      %v2102 = vunpack.c.h.b16 %v1923
      %v2103 = vunpack.c.l.b16 %v1924
      %v2104 = vunpack.c.h.b16 %v1924
      %v2105 = vunpack.c.l.b16 %v1925
      %v2106 = vunpack.c.l.b16 %v1926
      %v2107 = vunpack.c.h.b16 %v1926
      %v2108 = vunpack.c.l.b16 %v1927
      %v2109 = vunpack.c.h.b16 %v1927
      %v2110 = vunpack.c.l.b16 %v1928
      %v2111 = vunpack.c.h.b16 %v1928
      %v2112 = vunpack.c.l.b16 %v1929
      %v2113 = vunpack.c.l.b16 %v1930
      %v2114 = vunpack.c.h.b16 %v1930
      %v2115 = vunpack.c.l.b16 %v1931
      %v2116 = vunpack.c.h.b16 %v1931
      %v2117 = vunpack.c.l.b16 %v1932
      %v2118 = vunpack.c.h.b16 %v1932
      %v2119 = vunpack.c.l.b16 %v1933
      %v2120 = vunpack.c.l.b16 %v1934
      %v2121 = vunpack.c.h.b16 %v1934
      %v2122 = vunpack.c.l.b16 %v1935
      %v2123 = vunpack.c.h.b16 %v1935
      %v2124 = vunpack.c.l.b16 %v1936
      %v2125 = vunpack.c.h.b16 %v1936
      %v2126 = vunpack.c.l.b16 %v1937
      %v2127 = vunpack.c.l.b16 %v1938
      %v2128 = vunpack.c.h.b16 %v1938
      %v2129 = vunpack.c.l.b16 %v1939
      %v2130 = vunpack.c.h.b16 %v1939
      %v2131 = vunpack.c.l.b16 %v1940
      %v2132 = vunpack.c.h.b16 %v1940
      %v2133 = vunpack.c.l.b16 %v1941
      %v2134 = vunpack.c.l.b16 %v1942
      %v2135 = vunpack.c.h.b16 %v1942
      %v2136 = vunpack.c.l.b16 %v1943
      %v2137 = vunpack.c.h.b16 %v1943
      %v2138 = vunpack.c.l.b16 %v1944
      %v2139 = vunpack.c.h.b16 %v1944
      %v2140 = vunpack.c.l.b16 %v1945
      %v2141 = vunpack.c.l.b16 %v1946
      %v2142 = vunpack.c.h.b16 %v1946
      %v2143 = vunpack.c.l.b16 %v1947
      %v2144 = vunpack.c.h.b16 %v1947
      %v2145 = vunpack.c.l.b16 %v1948
      %v2146 = vunpack.c.h.b16 %v1948
      %v2147 = vunpack.c.l.b16 %v1949
      %v2148 = vunpack.c.l.b16 %v1950
      %v2149 = vunpack.c.h.b16 %v1950
      %v2150 = vunpack.c.l.b16 %v1951
      %v2151 = vunpack.c.h.b16 %v1951
      %v2152 = vunpack.c.l.b16 %v1952
      %v2153 = vunpack.c.h.b16 %v1952
      %v2154 = vunpack.c.l.b16 %v1953
      %v2155 = vunpack.c.l.b16 %v1954
      %v2156 = vunpack.c.h.b16 %v1954
      %v2157 = vunpack.c.l.b16 %v1955
      %v2158 = vunpack.c.h.b16 %v1955
      %v2159 = vunpack.c.l.b16 %v1956
      %v2160 = vunpack.c.h.b16 %v1956
      %v2161 = vunpack.c.l.b16 %v1957
      %v2162 = vunpack.c.l.b16 %v1958
      %v2163 = vunpack.c.h.b16 %v1958
      %v2164 = vunpack.c.l.b16 %v1959
      %v2165 = vunpack.c.h.b16 %v1959
      %v2166 = vunpack.c.l.b16 %v1960
      %v2167 = vunpack.c.h.b16 %v1960
      %v2168 = vunpack.c.l.b16 %v1961
      %v2169 = vunpack.c.l.b16 %v1962
      %v2170 = vunpack.c.h.b16 %v1962
      %v2171 = vunpack.c.l.b16 %v1963
      %v2172 = vunpack.c.h.b16 %v1963
      %v2173 = vunpack.c.l.b16 %v1964
      %v2174 = vunpack.c.h.b16 %v1964
      %v2175 = vunpack.c.l.b16 %v1965
      %v2176 = vunpack.c.l.b16 %v1966
      %v2177 = vunpack.c.h.b16 %v1966
      %v2178 = vunpack.c.l.b16 %v1967
      %v2179 = vunpack.c.h.b16 %v1967
      %v2180 = vunpack.c.l.b16 %v1968
      %v2181 = vunpack.c.h.b16 %v1968
      %v2182 = vunpack.c.l.b16 %v1969
      %v2183 = vpack.c.b16 %v2078, %v2071
      %v2184 = vpack.c.b16 %v2079, %v2072
      %v2185 = vpack.c.b16 %v2080, %v2073
      %v2186 = vpack.c.b16 %v2081, %v2074
      %v2187 = vpack.c.b16 %v2082, %v2075
      %v2188 = vpack.c.b16 %v2083, %v2076
      %v2189 = vpack.c.b16 %v2084, %v2077
      %v2190 = vpack.c.b16 %v2092, %v2085
      %v2191 = vpack.c.b16 %v2093, %v2086
      %v2192 = vpack.c.b16 %v2094, %v2087
      %v2193 = vpack.c.b16 %v2095, %v2088
      %v2194 = vpack.c.b16 %v2096, %v2089
      %v2195 = vpack.c.b16 %v2097, %v2090
      %v2196 = vpack.c.b16 %v2098, %v2091
      %v2197 = vpack.c.b16 %v2106, %v2099
      %v2198 = vpack.c.b16 %v2107, %v2100
      %v2199 = vpack.c.b16 %v2108, %v2101
      %v2200 = vpack.c.b16 %v2109, %v2102
      %v2201 = vpack.c.b16 %v2110, %v2103
      %v2202 = vpack.c.b16 %v2111, %v2104
      %v2203 = vpack.c.b16 %v2112, %v2105
      %v2204 = vpack.c.b16 %v2120, %v2113
      %v2205 = vpack.c.b16 %v2121, %v2114
      %v2206 = vpack.c.b16 %v2122, %v2115
      %v2207 = vpack.c.b16 %v2123, %v2116
      %v2208 = vpack.c.b16 %v2124, %v2117
      %v2209 = vpack.c.b16 %v2125, %v2118
      %v2210 = vpack.c.b16 %v2126, %v2119
      %v2211 = vpack.c.b16 %v2134, %v2127
      %v2212 = vpack.c.b16 %v2135, %v2128
      %v2213 = vpack.c.b16 %v2136, %v2129
      %v2214 = vpack.c.b16 %v2137, %v2130
      %v2215 = vpack.c.b16 %v2138, %v2131
      %v2216 = vpack.c.b16 %v2139, %v2132
      %v2217 = vpack.c.b16 %v2140, %v2133
      %v2218 = vpack.c.b16 %v2148, %v2141
      %v2219 = vpack.c.b16 %v2149, %v2142
      %v2220 = vpack.c.b16 %v2150, %v2143
      %v2221 = vpack.c.b16 %v2151, %v2144
      %v2222 = vpack.c.b16 %v2152, %v2145
      %v2223 = vpack.c.b16 %v2153, %v2146
      %v2224 = vpack.c.b16 %v2154, %v2147
      %v2225 = vpack.c.b16 %v2162, %v2155
      %v2226 = vpack.c.b16 %v2163, %v2156
      %v2227 = vpack.c.b16 %v2164, %v2157
      %v2228 = vpack.c.b16 %v2165, %v2158
      %v2229 = vpack.c.b16 %v2166, %v2159
      %v2230 = vpack.c.b16 %v2167, %v2160
      %v2231 = vpack.c.b16 %v2168, %v2161
      %v2232 = vpack.c.b16 %v2176, %v2169
      %v2233 = vpack.c.b16 %v2177, %v2170
      %v2234 = vpack.c.b16 %v2178, %v2171
      %v2235 = vpack.c.b16 %v2179, %v2172
      %v2236 = vpack.c.b16 %v2180, %v2173
      %v2237 = vpack.c.b16 %v2181, %v2174
      %v2238 = vpack.c.b16 %v2182, %v2175
      %2295 = vmatprep.subr.bf16.mxu0 %v2233
      %2296 = vmatpush1.bf16.msra.mxu0 %v2232
      %2297 = vmatprep.subr.bf16.mxu0 %v2226
      %2298 = vmatpush1.bf16.msra.mxu0 %v2225
      %2299 = vmatprep.subr.bf16.mxu0 %v2219
      %2300 = vmatpush1.bf16.msra.mxu0 %v2218
      %2301 = vmatprep.subr.bf16.mxu0 %v2212
      %2302 = vmatpush1.bf16.msra.mxu0 %v2211
      %2303 = vmatprep.subr.bf16.mxu0 %v2205
      %2304 = vmatpush1.bf16.msra.mxu0 %v2204
      %2305 = vmatprep.subr.bf16.mxu0 %v2198
      %2306 = vmatpush1.bf16.msra.mxu0 %v2197
      %2307 = vmatprep.subr.bf16.mxu0 %v2191
      %2308 = vmatpush1.bf16.msra.mxu0 %v2190
      %2309 = vmatprep.subr.bf16.mxu0 %v2184
      %2310 = vmatpush1.bf16.msra.mxu0 %v2183
      %2311 = vmatprep.subr.bf16.mxu0 0
      %2312 = vmatpush2.bf16.msra.mxu0 0
      %2313 = vmatprep.subr.bf16.mxu0 0
      %2314 = vmatpush2.bf16.msra.mxu0 0
      %2315 = vmatprep.subr.bf16.mxu0 0
      %2316 = vmatpush2.bf16.msra.mxu0 0
      %2317 = vmatprep.subr.bf16.mxu0 0
      %2318 = vmatpush2.bf16.msra.mxu0 0
      %2319 = vmatprep.subr.bf16.mxu0 0
      %2320 = vmatpush2.bf16.msra.mxu0 0
      %2321 = vmatprep.subr.bf16.mxu0 0
      %2322 = vmatpush2.bf16.msra.mxu0 0
      %2323 = vmatprep.subr.bf16.mxu0 0
      %2324 = vmatpush2.bf16.msra.mxu0 0
      %2325 = vmatprep.subr.bf16.mxu0 0
      %2326 = vmatpush2.bf16.msra.mxu0 0
      %2327 = vmatprep.mubr.bf16.mxu0 0
      %2328 = vmatmul.mubr.bf16.gmra.mxu0 %v1898
      %v2329 = vpop.f32.mrf.mxu0
      %v2330 = vadd.f32 %v1975, %v2329
      %v2331 = vpop.f32.mrf.mxu0
      %v2332 = vadd.f32 %v1979, %v2331
      %v2333 = vpop.f32.mrf.mxu0
      %v2334 = vadd.f32 %v1975, %v2333
      %v2335 = vpop.f32.mrf.mxu0
      %v2336 = vadd.f32 %v1979, %v2335
      %2337 = vmatprep.mubr.bf16.mxu0 0
      %2338 = vmatmul.mubr.bf16.gmra.mxu0 %v1899
      %v2339 = vpop.f32.mrf.mxu0
      %v2340 = vadd.f32 %v1975, %v2339
      %v2341 = vpop.f32.mrf.mxu0
      %v2342 = vadd.f32 %v1979, %v2341
      %v2343 = vpop.f32.mrf.mxu0
      %v2344 = vadd.f32 %v1975, %v2343
      %v2345 = vpop.f32.mrf.mxu0
      %v2346 = vadd.f32 %v1979, %v2345
      %2347 = vmatprep.mubr.bf16.mxu0 0
      %2348 = vmatmul.mubr.bf16.gmra.mxu0 %v1900
      %v2349 = vpop.f32.mrf.mxu0
      %v2350 = vadd.f32 %v1975, %v2349
      %v2351 = vpop.f32.mrf.mxu0
      %v2352 = vadd.f32 %v1979, %v2351
      %v2353 = vpop.f32.mrf.mxu0
      %v2354 = vadd.f32 %v1975, %v2353
      %v2355 = vpop.f32.mrf.mxu0
      %v2356 = vadd.f32 %v1979, %v2355
      %2357 = vmatprep.mubr.bf16.mxu0 0
      %2358 = vmatmul.mubr.bf16.gmra.mxu0 %v1901
      %v2359 = vpop.f32.mrf.mxu0
      %v2360 = vadd.f32 %v1975, %v2359
      %v2361 = vpop.f32.mrf.mxu0
      %v2362 = vadd.f32 %v1979, %v2361
      %v2363 = vpop.f32.mrf.mxu0
      %v2364 = vadd.f32 %v1975, %v2363
      %v2365 = vpop.f32.mrf.mxu0
      %v2366 = vadd.f32 %v1979, %v2365
      %2367 = vmatprep.mubr.bf16.mxu0 0
      %2368 = vmatmul.mubr.bf16.gmra.mxu0 %v1902
      %v2369 = vpop.f32.mrf.mxu0
      %v2370 = vadd.f32 %v1975, %v2369
      %v2371 = vpop.f32.mrf.mxu0
      %v2372 = vadd.f32 %v1979, %v2371
      %v2373 = vpop.f32.mrf.mxu0
      %v2374 = vadd.f32 %v1975, %v2373
      %v2375 = vpop.f32.mrf.mxu0
      %v2376 = vadd.f32 %v1979, %v2375
      %2377 = vmatprep.mubr.bf16.mxu0 0
      %2378 = vmatmul.mubr.bf16.gmra.mxu0 %v1903
      %v2379 = vpop.f32.mrf.mxu0
      %v2380 = vadd.f32 %v1975, %v2379
      %v2381 = vpop.f32.mrf.mxu0
      %v2382 = vadd.f32 %v1979, %v2381
      %v2383 = vpop.f32.mrf.mxu0
      %v2384 = vadd.f32 %v1975, %v2383
      %v2385 = vpop.f32.mrf.mxu0
      %v2386 = vadd.f32 %v1979, %v2385
      %2387 = vmatprep.mubr.bf16.mxu0 0
      %2388 = vmatmul.mubr.bf16.gmra.mxu0 %v1904
      %v2389 = vpop.f32.mrf.mxu0
      %v2390 = vadd.f32 %v1975, %v2389
      %v2391 = vpop.f32.mrf.mxu0
      %v2392 = vadd.f32 %v1979, %v2391
      %v2393 = vpop.f32.mrf.mxu0
      %v2394 = vadd.f32 %v1975, %v2393
      %v2395 = vpop.f32.mrf.mxu0
      %v2396 = vadd.f32 %v1979, %v2395
      %2397 = vmatprep.mubr.bf16.mxu0 0
      %2398 = vmatmul.mubr.bf16.gmra.mxu0 %v1905
      %v2399 = vpop.f32.mrf.mxu0
      %v2400 = vadd.f32 %v1975, %v2399
      %v2401 = vpop.f32.mrf.mxu0
      %v2402 = vadd.f32 %v1979, %v2401
      %v2403 = vpop.f32.mrf.mxu0
      %v2404 = vadd.f32 %v1975, %v2403
      %v2405 = vpop.f32.mrf.mxu0
      %v2406 = vadd.f32 %v1979, %v2405
      %2407 = vdwg.mxu0
      %2408 = vmatprep.subr.bf16.mxu0 %v2235
      %2409 = vmatpush1.bf16.msra.mxu0 %v2234
      %2410 = vmatprep.subr.bf16.mxu0 %v2228
      %2411 = vmatpush1.bf16.msra.mxu0 %v2227
      %2412 = vmatprep.subr.bf16.mxu0 %v2221
      %2413 = vmatpush1.bf16.msra.mxu0 %v2220
      %2414 = vmatprep.subr.bf16.mxu0 %v2214
      %2415 = vmatpush1.bf16.msra.mxu0 %v2213
      %2416 = vmatprep.subr.bf16.mxu0 %v2207
      %2417 = vmatpush1.bf16.msra.mxu0 %v2206
      %2418 = vmatprep.subr.bf16.mxu0 %v2200
      %2419 = vmatpush1.bf16.msra.mxu0 %v2199
      %2420 = vmatprep.subr.bf16.mxu0 %v2193
      %2421 = vmatpush1.bf16.msra.mxu0 %v2192
      %2422 = vmatprep.subr.bf16.mxu0 %v2186
      %2423 = vmatpush1.bf16.msra.mxu0 %v2185
      %2424 = vmatprep.subr.bf16.mxu0 0
      %2425 = vmatpush2.bf16.msra.mxu0 0
      %2426 = vmatprep.subr.bf16.mxu0 0
      %2427 = vmatpush2.bf16.msra.mxu0 0
      %2428 = vmatprep.subr.bf16.mxu0 0
      %2429 = vmatpush2.bf16.msra.mxu0 0
      %2430 = vmatprep.subr.bf16.mxu0 0
      %2431 = vmatpush2.bf16.msra.mxu0 0
      %2432 = vmatprep.subr.bf16.mxu0 0
      %2433 = vmatpush2.bf16.msra.mxu0 0
      %2434 = vmatprep.subr.bf16.mxu0 0
      %2435 = vmatpush2.bf16.msra.mxu0 0
      %2436 = vmatprep.subr.bf16.mxu0 0
      %2437 = vmatpush2.bf16.msra.mxu0 0
      %2438 = vmatprep.subr.bf16.mxu0 0
      %2439 = vmatpush2.bf16.msra.mxu0 0
      %2440 = vmatprep.mubr.bf16.mxu0 0
      %2441 = vmatmul.mubr.bf16.gmra.mxu0 %v1898
      %v2442 = vpop.f32.mrf.mxu0
      %v2443 = vadd.f32 %v1983, %v2442
      %v2444 = vpop.f32.mrf.mxu0
      %v2445 = vadd.f32 %v1987, %v2444
      %v2446 = vpop.f32.mrf.mxu0
      %v2447 = vadd.f32 %v1983, %v2446
      %v2448 = vpop.f32.mrf.mxu0
      %v2449 = vadd.f32 %v1987, %v2448
      %2450 = vmatprep.mubr.bf16.mxu0 0
      %2451 = vmatmul.mubr.bf16.gmra.mxu0 %v1899
      %v2452 = vpop.f32.mrf.mxu0
      %v2453 = vadd.f32 %v1983, %v2452
      %v2454 = vpop.f32.mrf.mxu0
      %v2455 = vadd.f32 %v1987, %v2454
      %v2456 = vpop.f32.mrf.mxu0
      %v2457 = vadd.f32 %v1983, %v2456
      %v2458 = vpop.f32.mrf.mxu0
      %v2459 = vadd.f32 %v1987, %v2458
      %2460 = vmatprep.mubr.bf16.mxu0 0
      %2461 = vmatmul.mubr.bf16.gmra.mxu0 %v1900
      %v2462 = vpop.f32.mrf.mxu0
      %v2463 = vadd.f32 %v1983, %v2462
      %v2464 = vpop.f32.mrf.mxu0
      %v2465 = vadd.f32 %v1987, %v2464
      %v2466 = vpop.f32.mrf.mxu0
      %v2467 = vadd.f32 %v1983, %v2466
      %v2468 = vpop.f32.mrf.mxu0
      %v2469 = vadd.f32 %v1987, %v2468
      %2470 = vmatprep.mubr.bf16.mxu0 0
      %2471 = vmatmul.mubr.bf16.gmra.mxu0 %v1901
      %v2472 = vpop.f32.mrf.mxu0
      %v2473 = vadd.f32 %v1983, %v2472
      %v2474 = vpop.f32.mrf.mxu0
      %v2475 = vadd.f32 %v1987, %v2474
      %v2476 = vpop.f32.mrf.mxu0
      %v2477 = vadd.f32 %v1983, %v2476
      %v2478 = vpop.f32.mrf.mxu0
      %v2479 = vadd.f32 %v1987, %v2478
      %2480 = vmatprep.mubr.bf16.mxu0 0
      %2481 = vmatmul.mubr.bf16.gmra.mxu0 %v1902
      %v2482 = vpop.f32.mrf.mxu0
      %v2483 = vadd.f32 %v1983, %v2482
      %v2484 = vpop.f32.mrf.mxu0
      %v2485 = vadd.f32 %v1987, %v2484
      %v2486 = vpop.f32.mrf.mxu0
      %v2487 = vadd.f32 %v1983, %v2486
      %v2488 = vpop.f32.mrf.mxu0
      %v2489 = vadd.f32 %v1987, %v2488
      %2490 = vmatprep.mubr.bf16.mxu0 0
      %2491 = vmatmul.mubr.bf16.gmra.mxu0 %v1903
      %v2492 = vpop.f32.mrf.mxu0
      %v2493 = vadd.f32 %v1983, %v2492
      %v2494 = vpop.f32.mrf.mxu0
      %v2495 = vadd.f32 %v1987, %v2494
      %v2496 = vpop.f32.mrf.mxu0
      %v2497 = vadd.f32 %v1983, %v2496
      %v2498 = vpop.f32.mrf.mxu0
      %v2499 = vadd.f32 %v1987, %v2498
      %2500 = vmatprep.mubr.bf16.mxu0 0
      %2501 = vmatmul.mubr.bf16.gmra.mxu0 %v1904
      %v2502 = vpop.f32.mrf.mxu0
      %v2503 = vadd.f32 %v1983, %v2502
      %v2504 = vpop.f32.mrf.mxu0
      %v2505 = vadd.f32 %v1987, %v2504
      %v2506 = vpop.f32.mrf.mxu0
      %v2507 = vadd.f32 %v1983, %v2506
      %v2508 = vpop.f32.mrf.mxu0
      %v2509 = vadd.f32 %v1987, %v2508
      %2510 = vmatprep.mubr.bf16.mxu0 0
      %2511 = vmatmul.mubr.bf16.gmra.mxu0 %v1905
      %v2512 = vpop.f32.mrf.mxu0
      %v2513 = vadd.f32 %v1983, %v2512
      %v2514 = vpop.f32.mrf.mxu0
      %v2515 = vadd.f32 %v1987, %v2514
      %v2516 = vpop.f32.mrf.mxu0
      %v2517 = vadd.f32 %v1983, %v2516
      %v2518 = vpop.f32.mrf.mxu0
      %v2519 = vadd.f32 %v1987, %v2518
      %2520 = vdwg.mxu0
      %2521 = vmatprep.subr.bf16.mxu0 %v2237
      %2522 = vmatpush1.bf16.msra.mxu0 %v2236
      %2523 = vmatprep.subr.bf16.mxu0 %v2230
      %2524 = vmatpush1.bf16.msra.mxu0 %v2229
      %2525 = vmatprep.subr.bf16.mxu0 %v2223
      %2526 = vmatpush1.bf16.msra.mxu0 %v2222
      %2527 = vmatprep.subr.bf16.mxu0 %v2216
      %2528 = vmatpush1.bf16.msra.mxu0 %v2215
      %2529 = vmatprep.subr.bf16.mxu0 %v2209
      %2530 = vmatpush1.bf16.msra.mxu0 %v2208
      %2531 = vmatprep.subr.bf16.mxu0 %v2202
      %2532 = vmatpush1.bf16.msra.mxu0 %v2201
      %2533 = vmatprep.subr.bf16.mxu0 %v2195
      %2534 = vmatpush1.bf16.msra.mxu0 %v2194
      %2535 = vmatprep.subr.bf16.mxu0 %v2188
      %2536 = vmatpush1.bf16.msra.mxu0 %v2187
      %2537 = vmatprep.subr.bf16.mxu0 0
      %2538 = vmatpush2.bf16.msra.mxu0 0
      %2539 = vmatprep.subr.bf16.mxu0 0
      %2540 = vmatpush2.bf16.msra.mxu0 0
      %2541 = vmatprep.subr.bf16.mxu0 0
      %2542 = vmatpush2.bf16.msra.mxu0 0
      %2543 = vmatprep.subr.bf16.mxu0 0
      %2544 = vmatpush2.bf16.msra.mxu0 0
      %2545 = vmatprep.subr.bf16.mxu0 0
      %2546 = vmatpush2.bf16.msra.mxu0 0
      %2547 = vmatprep.subr.bf16.mxu0 0
      %2548 = vmatpush2.bf16.msra.mxu0 0
      %2549 = vmatprep.subr.bf16.mxu0 0
      %2550 = vmatpush2.bf16.msra.mxu0 0
      %2551 = vmatprep.subr.bf16.mxu0 0
      %2552 = vmatpush2.bf16.msra.mxu0 0
      %2553 = vmatprep.mubr.bf16.mxu0 0
      %2554 = vmatmul.mubr.bf16.gmra.mxu0 %v1898
      %v2555 = vpop.f32.mrf.mxu0
      %v2556 = vadd.f32 %v1991, %v2555
      %v2557 = vpop.f32.mrf.mxu0
      %v2558 = vadd.f32 %v1995, %v2557
      %v2559 = vpop.f32.mrf.mxu0
      %v2560 = vadd.f32 %v1991, %v2559
      %v2561 = vpop.f32.mrf.mxu0
      %v2562 = vadd.f32 %v1995, %v2561
      %2563 = vmatprep.mubr.bf16.mxu0 0
      %2564 = vmatmul.mubr.bf16.gmra.mxu0 %v1899
      %v2565 = vpop.f32.mrf.mxu0
      %v2566 = vadd.f32 %v1991, %v2565
      %v2567 = vpop.f32.mrf.mxu0
      %v2568 = vadd.f32 %v1995, %v2567
      %v2569 = vpop.f32.mrf.mxu0
      %v2570 = vadd.f32 %v1991, %v2569
      %v2571 = vpop.f32.mrf.mxu0
      %v2572 = vadd.f32 %v1995, %v2571
      %2573 = vmatprep.mubr.bf16.mxu0 0
      %2574 = vmatmul.mubr.bf16.gmra.mxu0 %v1900
      %v2575 = vpop.f32.mrf.mxu0
      %v2576 = vadd.f32 %v1991, %v2575
      %v2577 = vpop.f32.mrf.mxu0
      %v2578 = vadd.f32 %v1995, %v2577
      %v2579 = vpop.f32.mrf.mxu0
      %v2580 = vadd.f32 %v1991, %v2579
      %v2581 = vpop.f32.mrf.mxu0
      %v2582 = vadd.f32 %v1995, %v2581
      %2583 = vmatprep.mubr.bf16.mxu0 0
      %2584 = vmatmul.mubr.bf16.gmra.mxu0 %v1901
      %v2585 = vpop.f32.mrf.mxu0
      %v2586 = vadd.f32 %v1991, %v2585
      %v2587 = vpop.f32.mrf.mxu0
      %v2588 = vadd.f32 %v1995, %v2587
      %v2589 = vpop.f32.mrf.mxu0
      %v2590 = vadd.f32 %v1991, %v2589
      %v2591 = vpop.f32.mrf.mxu0
      %v2592 = vadd.f32 %v1995, %v2591
      %2593 = vmatprep.mubr.bf16.mxu0 0
      %2594 = vmatmul.mubr.bf16.gmra.mxu0 %v1902
      %v2595 = vpop.f32.mrf.mxu0
      %v2596 = vadd.f32 %v1991, %v2595
      %v2597 = vpop.f32.mrf.mxu0
      %v2598 = vadd.f32 %v1995, %v2597
      %v2599 = vpop.f32.mrf.mxu0
      %v2600 = vadd.f32 %v1991, %v2599
      %v2601 = vpop.f32.mrf.mxu0
      %v2602 = vadd.f32 %v1995, %v2601
      %2603 = vmatprep.mubr.bf16.mxu0 0
      %2604 = vmatmul.mubr.bf16.gmra.mxu0 %v1903
      %v2605 = vpop.f32.mrf.mxu0
      %v2606 = vadd.f32 %v1991, %v2605
      %v2607 = vpop.f32.mrf.mxu0
      %v2608 = vadd.f32 %v1995, %v2607
      %v2609 = vpop.f32.mrf.mxu0
      %v2610 = vadd.f32 %v1991, %v2609
      %v2611 = vpop.f32.mrf.mxu0
      %v2612 = vadd.f32 %v1995, %v2611
      %2613 = vmatprep.mubr.bf16.mxu0 0
      %2614 = vmatmul.mubr.bf16.gmra.mxu0 %v1904
      %v2615 = vpop.f32.mrf.mxu0
      %v2616 = vadd.f32 %v1991, %v2615
      %v2617 = vpop.f32.mrf.mxu0
      %v2618 = vadd.f32 %v1995, %v2617
      %v2619 = vpop.f32.mrf.mxu0
      %v2620 = vadd.f32 %v1991, %v2619
      %v2621 = vpop.f32.mrf.mxu0
      %v2622 = vadd.f32 %v1995, %v2621
      %2623 = vmatprep.mubr.bf16.mxu0 0
      %2624 = vmatmul.mubr.bf16.gmra.mxu0 %v1905
      %v2625 = vpop.f32.mrf.mxu0
      %v2626 = vadd.f32 %v1991, %v2625
      %v2627 = vpop.f32.mrf.mxu0
      %v2628 = vadd.f32 %v1995, %v2627
      %v2629 = vpop.f32.mrf.mxu0
      %v2630 = vadd.f32 %v1991, %v2629
      %v2631 = vpop.f32.mrf.mxu0
      %v2632 = vadd.f32 %v1995, %v2631
      %2633 = vdwg.mxu0
      %2634 = vmatprep.subr.bf16.mxu0 0
      %2635 = vmatpush1.bf16.msra.mxu0 %v2238
      %2636 = vmatprep.subr.bf16.mxu0 0
      %2637 = vmatpush1.bf16.msra.mxu0 %v2231
      %2638 = vmatprep.subr.bf16.mxu0 0
      %2639 = vmatpush1.bf16.msra.mxu0 %v2224
      %2640 = vmatprep.subr.bf16.mxu0 0
      %2641 = vmatpush1.bf16.msra.mxu0 %v2217
      %2642 = vmatprep.subr.bf16.mxu0 0
      %2643 = vmatpush1.bf16.msra.mxu0 %v2210
      %2644 = vmatprep.subr.bf16.mxu0 0
      %2645 = vmatpush1.bf16.msra.mxu0 %v2203
      %2646 = vmatprep.subr.bf16.mxu0 0
      %2647 = vmatpush1.bf16.msra.mxu0 %v2196
      %2648 = vmatprep.subr.bf16.mxu0 0
      %2649 = vmatpush1.bf16.msra.mxu0 %v2189
      %2650 = vmatprep.subr.bf16.mxu0 0
      %2651 = vmatpush2.bf16.msra.mxu0 0
      %2652 = vmatprep.subr.bf16.mxu0 0
      %2653 = vmatpush2.bf16.msra.mxu0 0
      %2654 = vmatprep.subr.bf16.mxu0 0
      %2655 = vmatpush2.bf16.msra.mxu0 0
      %2656 = vmatprep.subr.bf16.mxu0 0
      %2657 = vmatpush2.bf16.msra.mxu0 0
      %2658 = vmatprep.subr.bf16.mxu0 0
      %2659 = vmatpush2.bf16.msra.mxu0 0
      %2660 = vmatprep.subr.bf16.mxu0 0
      %2661 = vmatpush2.bf16.msra.mxu0 0
      %2662 = vmatprep.subr.bf16.mxu0 0
      %2663 = vmatpush2.bf16.msra.mxu0 0
      %2664 = vmatprep.subr.bf16.mxu0 0
      %2665 = vmatpush2.bf16.msra.mxu0 0
      %2666 = vmatprep.mubr.bf16.mxu0 0
      %2667 = vmatmul.mubr.bf16.gmra.mxu0 %v1898
      %v2668 = vpop.f32.mrf.mxu0
      %v2669 = vadd.f32 %v1999, %v2668
      %v2670 = vpop.f32.mrf.mxu0
      %v2671 = vpop.f32.mrf.mxu0
      %v2672 = vadd.f32 %v1999, %v2671
      %v2673 = vpop.f32.mrf.mxu0
      %2674 = vmatprep.mubr.bf16.mxu0 0
      %2675 = vmatmul.mubr.bf16.gmra.mxu0 %v1899
      %v2676 = vpop.f32.mrf.mxu0
      %v2677 = vadd.f32 %v1999, %v2676
      %v2678 = vpop.f32.mrf.mxu0
      %v2679 = vpop.f32.mrf.mxu0
      %v2680 = vadd.f32 %v1999, %v2679
      %v2681 = vpop.f32.mrf.mxu0
      %2682 = vmatprep.mubr.bf16.mxu0 0
      %2683 = vmatmul.mubr.bf16.gmra.mxu0 %v1900
      %v2684 = vpop.f32.mrf.mxu0
      %v2685 = vadd.f32 %v1999, %v2684
      %v2686 = vpop.f32.mrf.mxu0
      %v2687 = vpop.f32.mrf.mxu0
      %v2688 = vadd.f32 %v1999, %v2687
      %v2689 = vpop.f32.mrf.mxu0
      %2690 = vmatprep.mubr.bf16.mxu0 0
      %2691 = vmatmul.mubr.bf16.gmra.mxu0 %v1901
      %v2692 = vpop.f32.mrf.mxu0
      %v2693 = vadd.f32 %v1999, %v2692
      %v2694 = vpop.f32.mrf.mxu0
      %v2695 = vpop.f32.mrf.mxu0
      %v2696 = vadd.f32 %v1999, %v2695
      %v2697 = vpop.f32.mrf.mxu0
      %2698 = vmatprep.mubr.bf16.mxu0 0
      %2699 = vmatmul.mubr.bf16.gmra.mxu0 %v1902
      %v2700 = vpop.f32.mrf.mxu0
      %v2701 = vadd.f32 %v1999, %v2700
      %v2702 = vpop.f32.mrf.mxu0
      %v2703 = vpop.f32.mrf.mxu0
      %v2704 = vadd.f32 %v1999, %v2703
      %v2705 = vpop.f32.mrf.mxu0
      %2706 = vmatprep.mubr.bf16.mxu0 0
      %2707 = vmatmul.mubr.bf16.gmra.mxu0 %v1903
      %v2708 = vpop.f32.mrf.mxu0
      %v2709 = vadd.f32 %v1999, %v2708
      %v2710 = vpop.f32.mrf.mxu0
      %v2711 = vpop.f32.mrf.mxu0
      %v2712 = vadd.f32 %v1999, %v2711
      %v2713 = vpop.f32.mrf.mxu0
      %2714 = vmatprep.mubr.bf16.mxu0 0
      %2715 = vmatmul.mubr.bf16.gmra.mxu0 %v1904
      %v2716 = vpop.f32.mrf.mxu0
      %v2717 = vadd.f32 %v1999, %v2716
      %v2718 = vpop.f32.mrf.mxu0
      %v2719 = vpop.f32.mrf.mxu0
      %v2720 = vadd.f32 %v1999, %v2719
      %v2721 = vpop.f32.mrf.mxu0
      %2722 = vmatprep.mubr.bf16.mxu0 0
      %2723 = vmatmul.mubr.bf16.gmra.mxu0 %v1905
      %v2724 = vpop.f32.mrf.mxu0
      %v2725 = vadd.f32 %v1999, %v2724
      %v2726 = vpop.f32.mrf.mxu0
      %v2727 = vpop.f32.mrf.mxu0
      %v2728 = vadd.f32 %v1999, %v2727
      %v2729 = vpop.f32.mrf.mxu0
      %2730 = vdwg.mxu0
      %v2731 = vmul.f32 %v2330, 0.5
      %v2732 = vmul.f32 %v2332, 0.5
      %v2733 = vmul.f32 %v2443, 0.5
      %v2734 = vmul.f32 %v2445, 0.5
      %v2735 = vmul.f32 %v2556, 0.5
      %v2736 = vmul.f32 %v2558, 0.5
      %v2737 = vmul.f32 %v2669, 0.5
      %v2738 = vmul.f32 %v2334, 0.5
      %v2739 = vmul.f32 %v2336, 0.5
      %v2740 = vmul.f32 %v2447, 0.5
      %v2741 = vmul.f32 %v2449, 0.5
      %v2742 = vmul.f32 %v2560, 0.5
      %v2743 = vmul.f32 %v2562, 0.5
      %v2744 = vmul.f32 %v2672, 0.5
      %v2745 = vmul.f32 %v2340, 0.5
      %v2746 = vmul.f32 %v2342, 0.5
      %v2747 = vmul.f32 %v2453, 0.5
      %v2748 = vmul.f32 %v2455, 0.5
      %v2749 = vmul.f32 %v2566, 0.5
      %v2750 = vmul.f32 %v2568, 0.5
      %v2751 = vmul.f32 %v2677, 0.5
      %v2752 = vmul.f32 %v2344, 0.5
      %v2753 = vmul.f32 %v2346, 0.5
      %v2754 = vmul.f32 %v2457, 0.5
      %v2755 = vmul.f32 %v2459, 0.5
      %v2756 = vmul.f32 %v2570, 0.5
      %v2757 = vmul.f32 %v2572, 0.5
      %v2758 = vmul.f32 %v2680, 0.5
      %v2759 = vmul.f32 %v2350, 0.5
      %v2760 = vmul.f32 %v2352, 0.5
      %v2761 = vmul.f32 %v2463, 0.5
      %v2762 = vmul.f32 %v2465, 0.5
      %v2763 = vmul.f32 %v2576, 0.5
      %v2764 = vmul.f32 %v2578, 0.5
      %v2765 = vmul.f32 %v2685, 0.5
      %v2766 = vmul.f32 %v2354, 0.5
      %v2767 = vmul.f32 %v2356, 0.5
      %v2768 = vmul.f32 %v2467, 0.5
      %v2769 = vmul.f32 %v2469, 0.5
      %v2770 = vmul.f32 %v2580, 0.5
      %v2771 = vmul.f32 %v2582, 0.5
      %v2772 = vmul.f32 %v2688, 0.5
      %v2773 = vmul.f32 %v2360, 0.5
      %v2774 = vmul.f32 %v2362, 0.5
      %v2775 = vmul.f32 %v2473, 0.5
      %v2776 = vmul.f32 %v2475, 0.5
      %v2777 = vmul.f32 %v2586, 0.5
      %v2778 = vmul.f32 %v2588, 0.5
      %v2779 = vmul.f32 %v2693, 0.5
      %v2780 = vmul.f32 %v2364, 0.5
      %v2781 = vmul.f32 %v2366, 0.5
      %v2782 = vmul.f32 %v2477, 0.5
      %v2783 = vmul.f32 %v2479, 0.5
      %v2784 = vmul.f32 %v2590, 0.5
      %v2785 = vmul.f32 %v2592, 0.5
      %v2786 = vmul.f32 %v2696, 0.5
      %v2787 = vmul.f32 %v2370, 0.5
      %v2788 = vmul.f32 %v2372, 0.5
      %v2789 = vmul.f32 %v2483, 0.5
      %v2790 = vmul.f32 %v2485, 0.5
      %v2791 = vmul.f32 %v2596, 0.5
      %v2792 = vmul.f32 %v2598, 0.5
      %v2793 = vmul.f32 %v2701, 0.5
      %v2794 = vmul.f32 %v2374, 0.5
      %v2795 = vmul.f32 %v2376, 0.5
      %v2796 = vmul.f32 %v2487, 0.5
      %v2797 = vmul.f32 %v2489, 0.5
      %v2798 = vmul.f32 %v2600, 0.5
      %v2799 = vmul.f32 %v2602, 0.5
      %v2800 = vmul.f32 %v2704, 0.5
      %v2801 = vmul.f32 %v2380, 0.5
      %v2802 = vmul.f32 %v2382, 0.5
      %v2803 = vmul.f32 %v2493, 0.5
      %v2804 = vmul.f32 %v2495, 0.5
      %v2805 = vmul.f32 %v2606, 0.5
      %v2806 = vmul.f32 %v2608, 0.5
      %v2807 = vmul.f32 %v2709, 0.5
      %v2808 = vmul.f32 %v2384, 0.5
      %v2809 = vmul.f32 %v2386, 0.5
      %v2810 = vmul.f32 %v2497, 0.5
      %v2811 = vmul.f32 %v2499, 0.5
      %v2812 = vmul.f32 %v2610, 0.5
      %v2813 = vmul.f32 %v2612, 0.5
      %v2814 = vmul.f32 %v2712, 0.5
      %v2815 = vmul.f32 %v2390, 0.5
      %v2816 = vmul.f32 %v2392, 0.5
      %v2817 = vmul.f32 %v2503, 0.5
      %v2818 = vmul.f32 %v2505, 0.5
      %v2819 = vmul.f32 %v2616, 0.5
      %v2820 = vmul.f32 %v2618, 0.5
      %v2821 = vmul.f32 %v2717, 0.5
      %v2822 = vmul.f32 %v2394, 0.5
      %v2823 = vmul.f32 %v2396, 0.5
      %v2824 = vmul.f32 %v2507, 0.5
      %v2825 = vmul.f32 %v2509, 0.5
      %v2826 = vmul.f32 %v2620, 0.5
      %v2827 = vmul.f32 %v2622, 0.5
      %v2828 = vmul.f32 %v2720, 0.5
      %v2829 = vmul.f32 %v2400, 0.5
      %v2830 = vmul.f32 %v2402, 0.5
      %v2831 = vmul.f32 %v2513, 0.5
      %v2832 = vmul.f32 %v2515, 0.5
      %v2833 = vmul.f32 %v2626, 0.5
      %v2834 = vmul.f32 %v2628, 0.5
      %v2835 = vmul.f32 %v2725, 0.5
      %v2836 = vmul.f32 %v2404, 0.5
      %v2837 = vmul.f32 %v2406, 0.5
      %v2838 = vmul.f32 %v2517, 0.5
      %v2839 = vmul.f32 %v2519, 0.5
      %v2840 = vmul.f32 %v2630, 0.5
      %v2841 = vmul.f32 %v2632, 0.5
      %v2842 = vmul.f32 %v2728, 0.5
      %v2843 = vtanh.pop %v2731
      %v2844 = vtanh.pop %v2732
      %v2845 = vtanh.pop %v2733
      %v2846 = vtanh.pop %v2734
      %v2847 = vtanh.pop %v2735
      %v2848 = vtanh.pop %v2736
      %v2849 = vtanh.pop %v2737
      %v2850 = vtanh.pop %v2738
      %v2851 = vtanh.pop %v2739
      %v2852 = vtanh.pop %v2740
      %v2853 = vtanh.pop %v2741
      %v2854 = vtanh.pop %v2742
      %v2855 = vtanh.pop %v2743
      %v2856 = vtanh.pop %v2744
      %v2857 = vtanh.pop %v2745
      %v2858 = vtanh.pop %v2746
      %v2859 = vtanh.pop %v2747
      %v2860 = vtanh.pop %v2748
      %v2861 = vtanh.pop %v2749
      %v2862 = vtanh.pop %v2750
      %v2863 = vtanh.pop %v2751
      %v2864 = vtanh.pop %v2752
      %v2865 = vtanh.pop %v2753
      %v2866 = vtanh.pop %v2754
      %v2867 = vtanh.pop %v2755
      %v2868 = vtanh.pop %v2756
      %v2869 = vtanh.pop %v2757
      %v2870 = vtanh.pop %v2758
      %v2871 = vtanh.pop %v2759
      %v2872 = vtanh.pop %v2760
      %v2873 = vtanh.pop %v2761
      %v2874 = vtanh.pop %v2762
      %v2875 = vtanh.pop %v2763
      %v2876 = vtanh.pop %v2764
      %v2877 = vtanh.pop %v2765
      %v2878 = vtanh.pop %v2766
      %v2879 = vtanh.pop %v2767
      %v2880 = vtanh.pop %v2768
      %v2881 = vtanh.pop %v2769
      %v2882 = vtanh.pop %v2770
      %v2883 = vtanh.pop %v2771
      %v2884 = vtanh.pop %v2772
      %v2885 = vtanh.pop %v2773
      %v2886 = vtanh.pop %v2774
      %v2887 = vtanh.pop %v2775
      %v2888 = vtanh.pop %v2776
      %v2889 = vtanh.pop %v2777
      %v2890 = vtanh.pop %v2778
      %v2891 = vtanh.pop %v2779
      %v2892 = vtanh.pop %v2780
      %v2893 = vtanh.pop %v2781
      %v2894 = vtanh.pop %v2782
      %v2895 = vtanh.pop %v2783
      %v2896 = vtanh.pop %v2784
      %v2897 = vtanh.pop %v2785
      %v2898 = vtanh.pop %v2786
      %v2899 = vtanh.pop %v2787
      %v2900 = vtanh.pop %v2788
      %v2901 = vtanh.pop %v2789
      %v2902 = vtanh.pop %v2790
      %v2903 = vtanh.pop %v2791
      %v2904 = vtanh.pop %v2792
      %v2905 = vtanh.pop %v2793
      %v2906 = vtanh.pop %v2794
      %v2907 = vtanh.pop %v2795
      %v2908 = vtanh.pop %v2796
      %v2909 = vtanh.pop %v2797
      %v2910 = vtanh.pop %v2798
      %v2911 = vtanh.pop %v2799
      %v2912 = vtanh.pop %v2800
      %v2913 = vtanh.pop %v2801
      %v2914 = vtanh.pop %v2802
      %v2915 = vtanh.pop %v2803
      %v2916 = vtanh.pop %v2804
      %v2917 = vtanh.pop %v2805
      %v2918 = vtanh.pop %v2806
      %v2919 = vtanh.pop %v2807
      %v2920 = vtanh.pop %v2808
      %v2921 = vtanh.pop %v2809
      %v2922 = vtanh.pop %v2810
      %v2923 = vtanh.pop %v2811
      %v2924 = vtanh.pop %v2812
      %v2925 = vtanh.pop %v2813
      %v2926 = vtanh.pop %v2814
      %v2927 = vtanh.pop %v2815
      %v2928 = vtanh.pop %v2816
      %v2929 = vtanh.pop %v2817
      %v2930 = vtanh.pop %v2818
      %v2931 = vtanh.pop %v2819
      %v2932 = vtanh.pop %v2820
      %v2933 = vtanh.pop %v2821
      %v2934 = vtanh.pop %v2822
      %v2935 = vtanh.pop %v2823
      %v2936 = vtanh.pop %v2824
      %v2937 = vtanh.pop %v2825
      %v2938 = vtanh.pop %v2826
      %v2939 = vtanh.pop %v2827
      %v2940 = vtanh.pop %v2828
      %v2941 = vtanh.pop %v2829
      %v2942 = vtanh.pop %v2830
      %v2943 = vtanh.pop %v2831
      %v2944 = vtanh.pop %v2832
      %v2945 = vtanh.pop %v2833
      %v2946 = vtanh.pop %v2834
      %v2947 = vtanh.pop %v2835
      %v2948 = vtanh.pop %v2836
      %v2949 = vtanh.pop %v2837
      %v2950 = vtanh.pop %v2838
      %v2951 = vtanh.pop %v2839
      %v2952 = vtanh.pop %v2840
      %v2953 = vtanh.pop %v2841
      %v2954 = vtanh.pop %v2842
      %v2955 = vmul.f32 %v2843, 0.5
      %v2956 = vmul.f32 %v2844, 0.5
      %v2957 = vmul.f32 %v2845, 0.5
      %v2958 = vmul.f32 %v2846, 0.5
      %v2959 = vmul.f32 %v2847, 0.5
      %v2960 = vmul.f32 %v2848, 0.5
      %v2961 = vmul.f32 %v2849, 0.5
      %v2962 = vmul.f32 %v2850, 0.5
      %v2963 = vmul.f32 %v2851, 0.5
      %v2964 = vmul.f32 %v2852, 0.5
      %v2965 = vmul.f32 %v2853, 0.5
      %v2966 = vmul.f32 %v2854, 0.5
      %v2967 = vmul.f32 %v2855, 0.5
      %v2968 = vmul.f32 %v2856, 0.5
      %v2969 = vmul.f32 %v2857, 0.5
      %v2970 = vmul.f32 %v2858, 0.5
      %v2971 = vmul.f32 %v2859, 0.5
      %v2972 = vmul.f32 %v2860, 0.5
      %v2973 = vmul.f32 %v2861, 0.5
      %v2974 = vmul.f32 %v2862, 0.5
      %v2975 = vmul.f32 %v2863, 0.5
      %v2976 = vmul.f32 %v2864, 0.5
      %v2977 = vmul.f32 %v2865, 0.5
      %v2978 = vmul.f32 %v2866, 0.5
      %v2979 = vmul.f32 %v2867, 0.5
      %v2980 = vmul.f32 %v2868, 0.5
      %v2981 = vmul.f32 %v2869, 0.5
      %v2982 = vmul.f32 %v2870, 0.5
      %v2983 = vmul.f32 %v2871, 0.5
      %v2984 = vmul.f32 %v2872, 0.5
      %v2985 = vmul.f32 %v2873, 0.5
      %v2986 = vmul.f32 %v2874, 0.5
      %v2987 = vmul.f32 %v2875, 0.5
      %v2988 = vmul.f32 %v2876, 0.5
      %v2989 = vmul.f32 %v2877, 0.5
      %v2990 = vmul.f32 %v2878, 0.5
      %v2991 = vmul.f32 %v2879, 0.5
      %v2992 = vmul.f32 %v2880, 0.5
      %v2993 = vmul.f32 %v2881, 0.5
      %v2994 = vmul.f32 %v2882, 0.5
      %v2995 = vmul.f32 %v2883, 0.5
      %v2996 = vmul.f32 %v2884, 0.5
      %v2997 = vmul.f32 %v2885, 0.5
      %v2998 = vmul.f32 %v2886, 0.5
      %v2999 = vmul.f32 %v2887, 0.5
      %v3000 = vmul.f32 %v2888, 0.5
      %v3001 = vmul.f32 %v2889, 0.5
      %v3002 = vmul.f32 %v2890, 0.5
      %v3003 = vmul.f32 %v2891, 0.5
      %v3004 = vmul.f32 %v2892, 0.5
      %v3005 = vmul.f32 %v2893, 0.5
      %v3006 = vmul.f32 %v2894, 0.5
      %v3007 = vmul.f32 %v2895, 0.5
      %v3008 = vmul.f32 %v2896, 0.5
      %v3009 = vmul.f32 %v2897, 0.5
      %v3010 = vmul.f32 %v2898, 0.5
      %v3011 = vmul.f32 %v2899, 0.5
      %v3012 = vmul.f32 %v2900, 0.5
      %v3013 = vmul.f32 %v2901, 0.5
      %v3014 = vmul.f32 %v2902, 0.5
      %v3015 = vmul.f32 %v2903, 0.5
      %v3016 = vmul.f32 %v2904, 0.5
      %v3017 = vmul.f32 %v2905, 0.5
      %v3018 = vmul.f32 %v2906, 0.5
      %v3019 = vmul.f32 %v2907, 0.5
      %v3020 = vmul.f32 %v2908, 0.5
      %v3021 = vmul.f32 %v2909, 0.5
      %v3022 = vmul.f32 %v2910, 0.5
      %v3023 = vmul.f32 %v2911, 0.5
      %v3024 = vmul.f32 %v2912, 0.5
      %v3025 = vmul.f32 %v2913, 0.5
      %v3026 = vmul.f32 %v2914, 0.5
      %v3027 = vmul.f32 %v2915, 0.5
      %v3028 = vmul.f32 %v2916, 0.5
      %v3029 = vmul.f32 %v2917, 0.5
      %v3030 = vmul.f32 %v2918, 0.5
      %v3031 = vmul.f32 %v2919, 0.5
      %v3032 = vmul.f32 %v2920, 0.5
      %v3033 = vmul.f32 %v2921, 0.5
      %v3034 = vmul.f32 %v2922, 0.5
      %v3035 = vmul.f32 %v2923, 0.5
      %v3036 = vmul.f32 %v2924, 0.5
      %v3037 = vmul.f32 %v2925, 0.5
      %v3038 = vmul.f32 %v2926, 0.5
      %v3039 = vmul.f32 %v2927, 0.5
      %v3040 = vmul.f32 %v2928, 0.5
      %v3041 = vmul.f32 %v2929, 0.5
      %v3042 = vmul.f32 %v2930, 0.5
      %v3043 = vmul.f32 %v2931, 0.5
      %v3044 = vmul.f32 %v2932, 0.5
      %v3045 = vmul.f32 %v2933, 0.5
      %v3046 = vmul.f32 %v2934, 0.5
      %v3047 = vmul.f32 %v2935, 0.5
      %v3048 = vmul.f32 %v2936, 0.5
      %v3049 = vmul.f32 %v2937, 0.5
      %v3050 = vmul.f32 %v2938, 0.5
      %v3051 = vmul.f32 %v2939, 0.5
      %v3052 = vmul.f32 %v2940, 0.5
      %v3053 = vmul.f32 %v2941, 0.5
      %v3054 = vmul.f32 %v2942, 0.5
      %v3055 = vmul.f32 %v2943, 0.5
      %v3056 = vmul.f32 %v2944, 0.5
      %v3057 = vmul.f32 %v2945, 0.5
      %v3058 = vmul.f32 %v2946, 0.5
      %v3059 = vmul.f32 %v2947, 0.5
      %v3060 = vmul.f32 %v2948, 0.5
      %v3061 = vmul.f32 %v2949, 0.5
      %v3062 = vmul.f32 %v2950, 0.5
      %v3063 = vmul.f32 %v2951, 0.5
      %v3064 = vmul.f32 %v2952, 0.5
      %v3065 = vmul.f32 %v2953, 0.5
      %v3066 = vmul.f32 %v2954, 0.5
      %v3067 = vadd.f32 %v2955, 0.5
      %v3068 = vadd.f32 %v2956, 0.5
      %v3069 = vadd.f32 %v2957, 0.5
      %v3070 = vadd.f32 %v2958, 0.5
      %v3071 = vadd.f32 %v2959, 0.5
      %v3072 = vadd.f32 %v2960, 0.5
      %v3073 = vadd.f32 %v2961, 0.5
      %v3074 = vadd.f32 %v2962, 0.5
      %v3075 = vadd.f32 %v2963, 0.5
      %v3076 = vadd.f32 %v2964, 0.5
      %v3077 = vadd.f32 %v2965, 0.5
      %v3078 = vadd.f32 %v2966, 0.5
      %v3079 = vadd.f32 %v2967, 0.5
      %v3080 = vadd.f32 %v2968, 0.5
      %v3081 = vadd.f32 %v2969, 0.5
      %v3082 = vadd.f32 %v2970, 0.5
      %v3083 = vadd.f32 %v2971, 0.5
      %v3084 = vadd.f32 %v2972, 0.5
      %v3085 = vadd.f32 %v2973, 0.5
      %v3086 = vadd.f32 %v2974, 0.5
      %v3087 = vadd.f32 %v2975, 0.5
      %v3088 = vadd.f32 %v2976, 0.5
      %v3089 = vadd.f32 %v2977, 0.5
      %v3090 = vadd.f32 %v2978, 0.5
      %v3091 = vadd.f32 %v2979, 0.5
      %v3092 = vadd.f32 %v2980, 0.5
      %v3093 = vadd.f32 %v2981, 0.5
      %v3094 = vadd.f32 %v2982, 0.5
      %v3095 = vadd.f32 %v2983, 0.5
      %v3096 = vadd.f32 %v2984, 0.5
      %v3097 = vadd.f32 %v2985, 0.5
      %v3098 = vadd.f32 %v2986, 0.5
      %v3099 = vadd.f32 %v2987, 0.5
      %v3100 = vadd.f32 %v2988, 0.5
      %v3101 = vadd.f32 %v2989, 0.5
      %v3102 = vadd.f32 %v2990, 0.5
      %v3103 = vadd.f32 %v2991, 0.5
      %v3104 = vadd.f32 %v2992, 0.5
      %v3105 = vadd.f32 %v2993, 0.5
      %v3106 = vadd.f32 %v2994, 0.5
      %v3107 = vadd.f32 %v2995, 0.5
      %v3108 = vadd.f32 %v2996, 0.5
      %v3109 = vadd.f32 %v2997, 0.5
      %v3110 = vadd.f32 %v2998, 0.5
      %v3111 = vadd.f32 %v2999, 0.5
      %v3112 = vadd.f32 %v3000, 0.5
      %v3113 = vadd.f32 %v3001, 0.5
      %v3114 = vadd.f32 %v3002, 0.5
      %v3115 = vadd.f32 %v3003, 0.5
      %v3116 = vadd.f32 %v3004, 0.5
      %v3117 = vadd.f32 %v3005, 0.5
      %v3118 = vadd.f32 %v3006, 0.5
      %v3119 = vadd.f32 %v3007, 0.5
      %v3120 = vadd.f32 %v3008, 0.5
      %v3121 = vadd.f32 %v3009, 0.5
      %v3122 = vadd.f32 %v3010, 0.5
      %v3123 = vadd.f32 %v3011, 0.5
      %v3124 = vadd.f32 %v3012, 0.5
      %v3125 = vadd.f32 %v3013, 0.5
      %v3126 = vadd.f32 %v3014, 0.5
      %v3127 = vadd.f32 %v3015, 0.5
      %v3128 = vadd.f32 %v3016, 0.5
      %v3129 = vadd.f32 %v3017, 0.5
      %v3130 = vadd.f32 %v3018, 0.5
      %v3131 = vadd.f32 %v3019, 0.5
      %v3132 = vadd.f32 %v3020, 0.5
      %v3133 = vadd.f32 %v3021, 0.5
      %v3134 = vadd.f32 %v3022, 0.5
      %v3135 = vadd.f32 %v3023, 0.5
      %v3136 = vadd.f32 %v3024, 0.5
      %v3137 = vadd.f32 %v3025, 0.5
      %v3138 = vadd.f32 %v3026, 0.5
      %v3139 = vadd.f32 %v3027, 0.5
      %v3140 = vadd.f32 %v3028, 0.5
      %v3141 = vadd.f32 %v3029, 0.5
      %v3142 = vadd.f32 %v3030, 0.5
      %v3143 = vadd.f32 %v3031, 0.5
      %v3144 = vadd.f32 %v3032, 0.5
      %v3145 = vadd.f32 %v3033, 0.5
      %v3146 = vadd.f32 %v3034, 0.5
      %v3147 = vadd.f32 %v3035, 0.5
      %v3148 = vadd.f32 %v3036, 0.5
      %v3149 = vadd.f32 %v3037, 0.5
      %v3150 = vadd.f32 %v3038, 0.5
      %v3151 = vadd.f32 %v3039, 0.5
      %v3152 = vadd.f32 %v3040, 0.5
      %v3153 = vadd.f32 %v3041, 0.5
      %v3154 = vadd.f32 %v3042, 0.5
      %v3155 = vadd.f32 %v3043, 0.5
      %v3156 = vadd.f32 %v3044, 0.5
      %v3157 = vadd.f32 %v3045, 0.5
      %v3158 = vadd.f32 %v3046, 0.5
      %v3159 = vadd.f32 %v3047, 0.5
      %v3160 = vadd.f32 %v3048, 0.5
      %v3161 = vadd.f32 %v3049, 0.5
      %v3162 = vadd.f32 %v3050, 0.5
      %v3163 = vadd.f32 %v3051, 0.5
      %v3164 = vadd.f32 %v3052, 0.5
      %v3165 = vadd.f32 %v3053, 0.5
      %v3166 = vadd.f32 %v3054, 0.5
      %v3167 = vadd.f32 %v3055, 0.5
      %v3168 = vadd.f32 %v3056, 0.5
      %v3169 = vadd.f32 %v3057, 0.5
      %v3170 = vadd.f32 %v3058, 0.5
      %v3171 = vadd.f32 %v3059, 0.5
      %v3172 = vadd.f32 %v3060, 0.5
      %v3173 = vadd.f32 %v3061, 0.5
      %v3174 = vadd.f32 %v3062, 0.5
      %v3175 = vadd.f32 %v3063, 0.5
      %v3176 = vadd.f32 %v3064, 0.5
      %v3177 = vadd.f32 %v3065, 0.5
      %v3178 = vadd.f32 %v3066, 0.5
      %3179 = vst [vmem:[%s339] sm:$0xff] %v3067
      %3180 = vst [vmem:[%s339 + $0x8] sm:$0xff] %v3068
      %3181 = vst [vmem:[%s339 + $0x10] sm:$0xff] %v3069
      %3182 = vst [vmem:[%s339 + $0x18] sm:$0xff] %v3070
      %3183 = vst [vmem:[%s339 + $0x20] sm:$0xff] %v3071
      %3184 = vst [vmem:[%s339 + $0x28] sm:$0xff] %v3072
      %3185 = vst.msk [vmem:[%s339 + $0x30] sm:$0xff] %vm1085, %v3073
      %3186 = vst [vmem:[%s339 + $0x38] sm:$0xff] %v3074
      %3187 = vst [vmem:[%s339 + $0x40] sm:$0xff] %v3075
      %3188 = vst [vmem:[%s339 + $0x48] sm:$0xff] %v3076
      %3189 = vst [vmem:[%s339 + $0x50] sm:$0xff] %v3077
      %3190 = vst [vmem:[%s339 + $0x58] sm:$0xff] %v3078
      %3191 = vst [vmem:[%s339 + $0x60] sm:$0xff] %v3079
      %3192 = vst.msk [vmem:[%s339 + $0x68] sm:$0xff] %vm1085, %v3080
      %3193 = vst [vmem:[%s339 + $0x70] sm:$0xff] %v3081
      %3194 = vst [vmem:[%s339 + $0x78] sm:$0xff] %v3082
      %3195 = vst [vmem:[%s339 + $0x80] sm:$0xff] %v3083
      %3196 = vst [vmem:[%s339 + $0x88] sm:$0xff] %v3084
      %3197 = vst [vmem:[%s339 + $0x90] sm:$0xff] %v3085
      %3198 = vst [vmem:[%s339 + $0x98] sm:$0xff] %v3086
      %3199 = vst.msk [vmem:[%s339 + $0xa0] sm:$0xff] %vm1085, %v3087
      %3200 = vst [vmem:[%s339 + $0xa8] sm:$0xff] %v3088
      %3201 = vst [vmem:[%s339 + $0xb0] sm:$0xff] %v3089
      %3202 = vst [vmem:[%s339 + $0xb8] sm:$0xff] %v3090
      %3203 = vst [vmem:[%s339 + $0xc0] sm:$0xff] %v3091
      %3204 = vst [vmem:[%s339 + $0xc8] sm:$0xff] %v3092
      %3205 = vst [vmem:[%s339 + $0xd0] sm:$0xff] %v3093
      %3206 = vst.msk [vmem:[%s339 + $0xd8] sm:$0xff] %vm1085, %v3094
      %3207 = vst [vmem:[%s339 + $0xe0] sm:$0xff] %v3095
      %3208 = vst [vmem:[%s339 + $0xe8] sm:$0xff] %v3096
      %3209 = vst [vmem:[%s339 + $0xf0] sm:$0xff] %v3097
      %3210 = vst [vmem:[%s339 + $0xf8] sm:$0xff] %v3098
      %3211 = vst [vmem:[%s339 + $0x100] sm:$0xff] %v3099
      %3212 = vst [vmem:[%s339 + $0x108] sm:$0xff] %v3100
      %3213 = vst.msk [vmem:[%s339 + $0x110] sm:$0xff] %vm1085, %v3101
      %3214 = vst [vmem:[%s339 + $0x118] sm:$0xff] %v3102
      %3215 = vst [vmem:[%s339 + $0x120] sm:$0xff] %v3103
      %3216 = vst [vmem:[%s339 + $0x128] sm:$0xff] %v3104
      %3217 = vst [vmem:[%s339 + $0x130] sm:$0xff] %v3105
      %3218 = vst [vmem:[%s339 + $0x138] sm:$0xff] %v3106
      %3219 = vst [vmem:[%s339 + $0x140] sm:$0xff] %v3107
      %3220 = vst.msk [vmem:[%s339 + $0x148] sm:$0xff] %vm1085, %v3108
      %3221 = vst [vmem:[%s339 + $0x150] sm:$0xff] %v3109
      %3222 = vst [vmem:[%s339 + $0x158] sm:$0xff] %v3110
      %3223 = vst [vmem:[%s339 + $0x160] sm:$0xff] %v3111
      %3224 = vst [vmem:[%s339 + $0x168] sm:$0xff] %v3112
      %3225 = vst [vmem:[%s339 + $0x170] sm:$0xff] %v3113
      %3226 = vst [vmem:[%s339 + $0x178] sm:$0xff] %v3114
      %3227 = vst.msk [vmem:[%s339 + $0x180] sm:$0xff] %vm1085, %v3115
      %3228 = vst [vmem:[%s339 + $0x188] sm:$0xff] %v3116
      %3229 = vst [vmem:[%s339 + $0x190] sm:$0xff] %v3117
      %3230 = vst [vmem:[%s339 + $0x198] sm:$0xff] %v3118
      %3231 = vst [vmem:[%s339 + $0x1a0] sm:$0xff] %v3119
      %3232 = vst [vmem:[%s339 + $0x1a8] sm:$0xff] %v3120
      %3233 = vst [vmem:[%s339 + $0x1b0] sm:$0xff] %v3121
      %3234 = vst.msk [vmem:[%s339 + $0x1b8] sm:$0xff] %vm1085, %v3122
      %3235 = vst [vmem:[%s339 + $0x1c0] sm:$0xff] %v3123
      %3236 = vst [vmem:[%s339 + $0x1c8] sm:$0xff] %v3124
      %3237 = vst [vmem:[%s339 + $0x1d0] sm:$0xff] %v3125
      %3238 = vst [vmem:[%s339 + $0x1d8] sm:$0xff] %v3126
      %3239 = vst [vmem:[%s339 + $0x1e0] sm:$0xff] %v3127
      %3240 = vst [vmem:[%s339 + $0x1e8] sm:$0xff] %v3128
      %3241 = vst.msk [vmem:[%s339 + $0x1f0] sm:$0xff] %vm1085, %v3129
      %3242 = vst [vmem:[%s339 + $0x1f8] sm:$0xff] %v3130
      %3243 = vst [vmem:[%s339 + $0x200] sm:$0xff] %v3131
      %3244 = vst [vmem:[%s339 + $0x208] sm:$0xff] %v3132
      %3245 = vst [vmem:[%s339 + $0x210] sm:$0xff] %v3133
      %3246 = vst [vmem:[%s339 + $0x218] sm:$0xff] %v3134
      %3247 = vst [vmem:[%s339 + $0x220] sm:$0xff] %v3135
      %3248 = vst.msk [vmem:[%s339 + $0x228] sm:$0xff] %vm1085, %v3136
      %3249 = vst [vmem:[%s339 + $0x230] sm:$0xff] %v3137
      %3250 = vst [vmem:[%s339 + $0x238] sm:$0xff] %v3138
      %3251 = vst [vmem:[%s339 + $0x240] sm:$0xff] %v3139
      %3252 = vst [vmem:[%s339 + $0x248] sm:$0xff] %v3140
      %3253 = vst [vmem:[%s339 + $0x250] sm:$0xff] %v3141
      %3254 = vst [vmem:[%s339 + $0x258] sm:$0xff] %v3142
      %3255 = vst.msk [vmem:[%s339 + $0x260] sm:$0xff] %vm1085, %v3143
      %3256 = vst [vmem:[%s339 + $0x268] sm:$0xff] %v3144
      %3257 = vst [vmem:[%s339 + $0x270] sm:$0xff] %v3145
      %3258 = vst [vmem:[%s339 + $0x278] sm:$0xff] %v3146
      %3259 = vst [vmem:[%s339 + $0x280] sm:$0xff] %v3147
      %3260 = vst [vmem:[%s339 + $0x288] sm:$0xff] %v3148
      %3261 = vst [vmem:[%s339 + $0x290] sm:$0xff] %v3149
      %3262 = vst.msk [vmem:[%s339 + $0x298] sm:$0xff] %vm1085, %v3150
      %3263 = vst [vmem:[%s339 + $0x2a0] sm:$0xff] %v3151
      %3264 = vst [vmem:[%s339 + $0x2a8] sm:$0xff] %v3152
      %3265 = vst [vmem:[%s339 + $0x2b0] sm:$0xff] %v3153
      %3266 = vst [vmem:[%s339 + $0x2b8] sm:$0xff] %v3154
      %3267 = vst [vmem:[%s339 + $0x2c0] sm:$0xff] %v3155
      %3268 = vst [vmem:[%s339 + $0x2c8] sm:$0xff] %v3156
      %3269 = vst.msk [vmem:[%s339 + $0x2d0] sm:$0xff] %vm1085, %v3157
      %3270 = vst [vmem:[%s339 + $0x2d8] sm:$0xff] %v3158
      %3271 = vst [vmem:[%s339 + $0x2e0] sm:$0xff] %v3159
      %3272 = vst [vmem:[%s339 + $0x2e8] sm:$0xff] %v3160
      %3273 = vst [vmem:[%s339 + $0x2f0] sm:$0xff] %v3161
      %3274 = vst [vmem:[%s339 + $0x2f8] sm:$0xff] %v3162
      %3275 = vst [vmem:[%s339 + $0x300] sm:$0xff] %v3163
      %3276 = vst.msk [vmem:[%s339 + $0x308] sm:$0xff] %vm1085, %v3164
      %3277 = vst [vmem:[%s339 + $0x310] sm:$0xff] %v3165
      %3278 = vst [vmem:[%s339 + $0x318] sm:$0xff] %v3166
      %3279 = vst [vmem:[%s339 + $0x320] sm:$0xff] %v3167
      %3280 = vst [vmem:[%s339 + $0x328] sm:$0xff] %v3168
      %3281 = vst [vmem:[%s339 + $0x330] sm:$0xff] %v3169
      %3282 = vst [vmem:[%s339 + $0x338] sm:$0xff] %v3170
      %3283 = vst.msk [vmem:[%s339 + $0x340] sm:$0xff] %vm1085, %v3171
      %3284 = vst [vmem:[%s339 + $0x348] sm:$0xff] %v3172
      %3285 = vst [vmem:[%s339 + $0x350] sm:$0xff] %v3173
      %3286 = vst [vmem:[%s339 + $0x358] sm:$0xff] %v3174
      %3287 = vst [vmem:[%s339 + $0x360] sm:$0xff] %v3175
      %3288 = vst [vmem:[%s339 + $0x368] sm:$0xff] %v3176
      %3289 = vst [vmem:[%s339 + $0x370] sm:$0xff] %v3177
      %3290 = vst.msk [vmem:[%s339 + $0x378] sm:$0xff] %vm1085, %v3178
      %s3291 = smul.u32 16, %s20
      %p3292 = scmp.lt.s32.totalorder %s3291, 31
      %s3293 = scalar_select %p3292, %s3291, 31
      %s3294 = smul.addr %s3293, 7
      %s3295 = smul.addr %s3294, 8
      %s3296 = scalar_lea.vmem %s9, %s3295
      // Predicated region
      $region57: #{tpu_custom_call.1} parent=55 // pred_check
        %p3297 = pneg %p232
      $region58: #{tpu_custom_call.1} parent=55 // pred_check_branch
        %3299 = sbr.rel (%p3297) target = $region60
      $region59: #{tpu_custom_call.1} parent=55 // pred_region
        %s3300 = smul.u32 16, %s20
      $region60: #{tpu_custom_call.1} parent=55 // pred_fallthru
        _
    $region56: #{tpu_custom_call.1} parent=5 // pred_fallthru
      _
    %p3301 = scmp.le.s32.totalorder 2, %s15
    // Predicated region
    $region61: #{tpu_custom_call.1} parent=5 // pred_check
      %p3302 = pneg %p3301
    $region62: #{tpu_custom_call.1} parent=5 // pred_check_branch
      %3304 = sbr.rel (%p3302) target = $region64
    $region63: #{tpu_custom_call.1} parent=5 // pred_region
      %s3305 = ssub.s32 %s15, 2
      // Predicated region
      $region65: #{tpu_custom_call.1} parent=63 // pred_check
        %p3306 = pneg %p238
      $region66: #{tpu_custom_call.1} parent=63 // pred_check_branch
        %3308 = sbr.rel (%p3306) target = $region68
      $region67: #{tpu_custom_call.1} parent=63 // pred_region
        %s3309 = smul.u32 16, %s21
        %p3310 = scmp.lt.s32.totalorder %s3309, 31
        %s3311 = scalar_select %p3310, %s3309, 31
        %s3312 = smul.addr %s3311, 7
        %s3313 = smul.addr %s3312, 8
        %s3314 = scalar_lea.vmem %s9, %s3313
      $region68: #{tpu_custom_call.1} parent=63 // pred_fallthru
        _
    $region64: #{tpu_custom_call.1} parent=5 // pred_fallthru
      _
  $region6: #{tpu_custom_call.1} parent=0 // loop_footer
    %s19 = sadd.s32 1, %s15
  $region7: #{tpu_custom_call.1} parent=0 // loop_footer_branch
    %14 = sbr.rel target = $region3
  $region8: #{tpu_custom_call.1} parent=0 // loop_exit
    _

</llo_original>
